<compile_context>
chip_gen: v5e
topology: v5e:2x2
jax: 0.10.0
libtpu: 0.0.40
codegen_flags: <defaults>
</compile_context>

<pallas_src>
import jax
import jax.numpy as jnp
from jax.experimental import pallas as pl
from jax.experimental.pallas import tpu as pltpu

# ---------------------------------------------------------------------------
# Static network dimensions (LeNet on 28x28 input)
# ---------------------------------------------------------------------------
IN_HW = 28                     # input spatial size
KS = 5                         # conv kernel size
C1, C2 = 6, 16                 # conv output channels
CONV1_HW = IN_HW - KS + 1      # 24
POOL1_HW = CONV1_HW // 2       # 12
CONV2_HW = POOL1_HW - KS + 1   # 8
POOL2_HW = CONV2_HW // 2       # 4
P1_LANES = C1 * POOL1_HW       # 72   pool1 lanes:  c*12 + w
P2_LANES = POOL2_HW * C2       # 64   conv2 lanes:  w2*16 + co
K1 = KS * IN_HW                # 140  conv1 contraction (kh folded): kh*28 + col
F1, F2, F3 = 120, 84, 10       # fc sizes
FPAD = 128                     # fc lane padding
B_TILE = 8                     # images per grid step (tunable, keep multiple of 8)


# ---------------------------------------------------------------------------
# Fused LeNet kernel: one grid step == B_TILE images
# ---------------------------------------------------------------------------
def _lenet_kernel(xs_ref, m1_ref, b1_ref, m2_ref, b2_ref,
                  w1h_ref, fb1_ref, w2_ref, fb2_ref, w3_ref, fb3_ref, out_ref):
    f32 = jnp.float32
    bt = out_ref.shape[0]                                  # B_TILE

    # ---- conv1 (kh,kw folded) + bias + relu + fused 2x2/2 max-pool -------------
    # xs_ref[0, rp] : (12*bt, 140)  rows = h*bt + b  (h = pooled output row),
    #                               lanes = kh*28 + input_col,  rp = output-row parity
    # m1_ref[cp]    : (140, 72)     output lanes c*12 + w2 (w2 = pooled output col),
    #                               cp = output-col parity
    m1e, m1o = m1_ref[0], m1_ref[1]
    y = None
    for rp in range(2):
        lhs = xs_ref[0, rp]                                # (12*bt, 140)
        for rhs in (m1e, m1o):
            t = jnp.dot(lhs, rhs, preferred_element_type=f32)
            y = t if y is None else jnp.maximum(y, t)      # max over 2x2 window
    p1 = jnp.maximum(y + b1_ref[...], 0.0)                 # (12*bt, 72)

    # ---- conv2 (kw folded): 10 dots, rows oh*bt + b, lanes w2*16 + co ----------
    acc_e = jnp.zeros((CONV2_HW * bt, P2_LANES), f32)
    acc_o = jnp.zeros((CONV2_HW * bt, P2_LANES), f32)
    for kh in range(KS):
        lhs2 = p1[kh * bt:(kh + CONV2_HW) * bt, :]         # (8*bt, 72) aligned slice
        acc_e = acc_e + jnp.dot(lhs2, m2_ref[0, kh], preferred_element_type=f32)
        acc_o = acc_o + jnp.dot(lhs2, m2_ref[1, kh], preferred_element_type=f32)
    cm = jnp.maximum(acc_e, acc_o)                         # column-pooled (8*bt, 64)

    # ---- pool2 rows + bias + relu + flatten + fc1 (sum of 4 row-block matmuls) -
    h = jnp.zeros((bt, FPAD), f32)
    for h2 in range(POOL2_HW):
        blk = jnp.maximum(cm[(2 * h2) * bt:(2 * h2 + 1) * bt, :],
                          cm[(2 * h2 + 1) * bt:(2 * h2 + 2) * bt, :])   # (bt, 64)
        p2b = jnp.maximum(blk + b2_ref[...], 0.0)
        h = h + jnp.dot(p2b, w1h_ref[h2], preferred_element_type=f32)
    h = jnp.maximum(h + fb1_ref[...], 0.0)                 # (bt, 128)

    # ---- fc2 / fc3 --------------------------------------------------------------
    h = jnp.maximum(jnp.dot(h, w2_ref[...], preferred_element_type=f32)
                    + fb2_ref[...], 0.0)
    out_ref[...] = (jnp.dot(h, w3_ref[...], preferred_element_type=f32)
                    + fb3_ref[...])                        # lane-dense (bt, 128)


# ---------------------------------------------------------------------------
# One-time host-side repacking of the PyTorch-layout parameters
# ---------------------------------------------------------------------------
def pack_params(p):
    f32 = jnp.float32
    cp = jnp.arange(2)

    # conv1:  m1[cp, kh*28 + j, c*12 + w2] = w1[c, 0, kh, j - (2*w2 + cp)]  (masked)
    w1s = p["conv1_w"].astype(f32)[:, 0]                           # (6, 5, 5)
    j = jnp.arange(IN_HW)
    w2i = jnp.arange(POOL1_HW)
    kw = j[None, :, None] - 2 * w2i[None, None, :] - cp[:, None, None]     # (2,28,12)
    valid = (kw >= 0) & (kw < KS)
    vals = w1s[:, :, jnp.clip(kw, 0, KS - 1)] * valid[None, None]  # (6,5,2,28,12)
    m1 = vals.transpose(2, 1, 3, 0, 4).reshape(2, K1, P1_LANES)    # (2,140,72)
    b1 = jnp.repeat(p["conv1_b"].astype(f32), POOL1_HW).reshape(1, P1_LANES)

    # conv2:  m2[cp, kh, ci*12 + x, w2*16 + co] = w2[co, ci, kh, x - (2*w2 + cp)]
    w2w = p["conv2_w"].astype(f32)                                 # (16, 6, 5, 5)
    xc = jnp.arange(POOL1_HW)
    w2o = jnp.arange(POOL2_HW)
    kw2 = xc[None, :, None] - 2 * w2o[None, None, :] - cp[:, None, None]   # (2,12,4)
    valid2 = (kw2 >= 0) & (kw2 < KS)
    vals2 = (w2w[:, :, :, jnp.clip(kw2, 0, KS - 1)]
             * valid2[None, None, None])                           # (16,6,5,2,12,4)
    m2 = vals2.transpose(3, 2, 1, 4, 5, 0).reshape(2, KS, C1 * POOL1_HW, P2_LANES)
    b2 = jnp.tile(p["conv2_b"].astype(f32), POOL2_HW).reshape(1, P2_LANES)

    # fc1: fold torch NCHW flatten (f = co*16 + h2*4 + w2) into per-h2 weight blocks
    w1h = p["fc1_w"].astype(f32).reshape(F1, C2, POOL2_HW, POOL2_HW)   # (120,16,4,4)
    w1h = w1h.transpose(2, 3, 1, 0).reshape(POOL2_HW, P2_LANES, F1)    # (4,64,120)
    w1h = jnp.pad(w1h, ((0, 0), (0, 0), (0, FPAD - F1)))               # (4,64,128)
    fb1 = jnp.pad(p["fc1_b"].astype(f32), (0, FPAD - F1)).reshape(1, FPAD)
    w2p = jnp.pad(p["fc2_w"].astype(f32).T, ((0, FPAD - F1), (0, FPAD - F2)))
    fb2 = jnp.pad(p["fc2_b"].astype(f32), (0, FPAD - F2)).reshape(1, FPAD)
    w3p = jnp.pad(p["fc3_w"].astype(f32).T, ((0, FPAD - F2), (0, FPAD - F3)))
    fb3 = jnp.pad(p["fc3_b"].astype(f32), (0, FPAD - F3)).reshape(1, FPAD)

    return dict(m1=m1, b1=b1, m2=m2, b2=b2, w1h=w1h, fb1=fb1,
                w2=w2p, fb2=fb2, w3=w3p, fb3=fb3)


# ---------------------------------------------------------------------------
# Wrapper-side layout plumbing: parity-split + kh-unrolled input slabs
# ---------------------------------------------------------------------------
def _pack_inputs(x, bt):
    """x: (B,1,28,28) -> (G, 2, 12*bt, 140); rows h*bt + b, lanes kh*28 + col."""
    b = x.shape[0]
    nb = ((b + bt - 1) // bt) * bt
    g = nb // bt
    xp = jnp.pad(x.reshape(b, IN_HW, IN_HW).astype(jnp.float32),
                 ((0, nb - b), (0, 0), (0, 0)))
    slabs = []
    for rp in range(2):                                    # output-row parity
        taps = [xp[:, rp + kh: rp + kh + 2 * POOL1_HW: 2, :] for kh in range(KS)]
        slabs.append(jnp.concatenate(taps, axis=-1))       # (nb, 12, 140)
    xs = jnp.stack(slabs, axis=0)                          # (2, nb, 12, 140)
    xs = xs.reshape(2, g, bt, POOL1_HW, K1).transpose(1, 0, 3, 2, 4)
    return xs.reshape(g, 2, POOL1_HW * bt, K1), nb, g


# ---------------------------------------------------------------------------
# Fused forward pass (single pallas_call)
# ---------------------------------------------------------------------------
@jax.jit
def lenet_forward(packed, x):
    """x: (B, 1, 28, 28) float32 NCHW (same as the PyTorch module)."""
    b = x.shape[0]
    xs, nb, g = _pack_inputs(x, B_TILE)

    def const_spec(a):
        s = a.shape
        return pl.BlockSpec(s, lambda i, n=len(s): (0,) * n)

    out = pl.pallas_call(
        _lenet_kernel,
        out_shape=jax.ShapeDtypeStruct((nb, FPAD), jnp.float32),
        grid=(g,),
        in_specs=[
            pl.BlockSpec((1, 2, POOL1_HW * B_TILE, K1), lambda i: (i, 0, 0, 0)),
            const_spec(packed["m1"]), const_spec(packed["b1"]),
            const_spec(packed["m2"]), const_spec(packed["b2"]),
            const_spec(packed["w1h"]), const_spec(packed["fb1"]),
            const_spec(packed["w2"]), const_spec(packed["fb2"]),
            const_spec(packed["w3"]), const_spec(packed["fb3"]),
        ],
        out_specs=pl.BlockSpec((B_TILE, FPAD), lambda i: (i, 0)),
        compiler_params=pltpu.CompilerParams(
            dimension_semantics=("parallel",)),
    )(xs, packed["m1"], packed["b1"], packed["m2"], packed["b2"],
      packed["w1h"], packed["fb1"], packed["w2"], packed["fb2"],
      packed["w3"], packed["fb3"])
    return out[:b, :F3]


# ---------------------------------------------------------------------------
# Pure-JAX reference (mirrors the PyTorch forward) and parameter init
# ---------------------------------------------------------------------------
def reference_forward(p, x):
    dn = ("NCHW", "OIHW", "NCHW")
    prec = jax.lax.Precision.HIGHEST

    def conv(z, w, b):
        y = jax.lax.conv_general_dilated(z, w, (1, 1), "VALID",
                                         dimension_numbers=dn, precision=prec)
        return y + b[None, :, None, None]

    def pool(z):
        return jax.lax.reduce_window(z, -jnp.inf, jax.lax.max,
                                     (1, 1, 2, 2), (1, 1, 2, 2), "VALID")

    z = pool(jax.nn.relu(conv(x, p["conv1_w"], p["conv1_b"])))
    z = pool(jax.nn.relu(conv(z, p["conv2_w"], p["conv2_b"])))
    z = z.reshape(z.shape[0], -1)                          # NCHW flatten, like .view
    z = jax.nn.relu(jnp.dot(z, p["fc1_w"].T, precision=prec) + p["fc1_b"])
    z = jax.nn.relu(jnp.dot(z, p["fc2_w"].T, precision=prec) + p["fc2_b"])
    return jnp.dot(z, p["fc3_w"].T, precision=prec) + p["fc3_b"]


def init_params(key):
    ks = jax.random.split(key, 10)
    s = 0.1
    return {
        "conv1_w": s * jax.random.normal(ks[0], (C1, 1, KS, KS), jnp.float32),
        "conv1_b": s * jax.random.normal(ks[1], (C1,), jnp.float32),
        "conv2_w": s * jax.random.normal(ks[2], (C2, C1, KS, KS), jnp.float32),
        "conv2_b": s * jax.random.normal(ks[3], (C2,), jnp.float32),
        "fc1_w": s * jax.random.normal(ks[4], (F1, C2 * POOL2_HW * POOL2_HW), jnp.float32),
        "fc1_b": s * jax.random.normal(ks[5], (F1,), jnp.float32),
        "fc2_w": s * jax.random.normal(ks[6], (F2, F1), jnp.float32),
        "fc2_b": s * jax.random.normal(ks[7], (F2,), jnp.float32),
        "fc3_w": s * jax.random.normal(ks[8], (F3, F2), jnp.float32),
        "fc3_b": s * jax.random.normal(ks[9], (F3,), jnp.float32),
    }


if __name__ == "__main__":
    key = jax.random.PRNGKey(0)
    pkey, xkey, xkey2 = jax.random.split(key, 3)
    params = init_params(pkey)
    packed = pack_params(params)            # one-time host-side repacking

    # small MNIST-sized batch (the module's 16*4*4 flatten implies 28x28 inputs)
    x = jax.random.normal(xkey, (2, 1, IN_HW, IN_HW), jnp.float32)
    out = jax.block_until_ready(lenet_forward(packed, x))
    assert out.shape == (2, F3) and out.dtype == jnp.float32
    ref = jax.block_until_ready(jax.jit(reference_forward)(params, x))
    err = float(jnp.max(jnp.abs(out - ref)))
    assert jnp.allclose(out, ref, atol=1e-3, rtol=1e-3), f"max abs diff {err:.3e}"

    # second check: batch not a multiple of the tile -> padding + 2 grid steps
    x2 = jax.random.normal(xkey2, (9, 1, IN_HW, IN_HW), jnp.float32)
    out2 = jax.block_until_ready(lenet_forward(packed, x2))
    ref2 = jax.block_until_ready(jax.jit(reference_forward)(params, x2))
    err2 = float(jnp.max(jnp.abs(out2 - ref2)))
    assert out2.shape == (9, F3)
    assert jnp.allclose(out2, ref2, atol=1e-3, rtol=1e-3), f"max abs diff {err2:.3e}"

    print("KERNEL_OK")
</pallas_src>

<mosaic_0001>
module attributes {stable_mosaic.version = 11 : i64} {
  func.func @_lenet_kernel(%arg0: i32, %arg1: memref<1x2x96x140xf32, #tpu.memory_space<vmem>>, %arg2: memref<2x140x72xf32, #tpu.memory_space<vmem>>, %arg3: memref<1x72xf32, #tpu.memory_space<vmem>>, %arg4: memref<2x5x72x64xf32, #tpu.memory_space<vmem>>, %arg5: memref<1x64xf32, #tpu.memory_space<vmem>>, %arg6: memref<4x64x128xf32, #tpu.memory_space<vmem>>, %arg7: memref<1x128xf32, #tpu.memory_space<vmem>>, %arg8: memref<128x128xf32, #tpu.memory_space<vmem>>, %arg9: memref<1x128xf32, #tpu.memory_space<vmem>>, %arg10: memref<128x128xf32, #tpu.memory_space<vmem>>, %arg11: memref<1x128xf32, #tpu.memory_space<vmem>>, %arg12: memref<8x128xf32, #tpu.memory_space<vmem>>) attributes {dimension_semantics = [#tpu.dimension_semantics<parallel>], iteration_bounds = array<i64: 1>, scalar_prefetch = 0 : i64, scratch_operands = 0 : i64, tpu.core_type = #tpu.core_type<tc>, window_params = [{transform_indices = @transform_0, window_bounds = array<i64: 1, 2, 96, 140>}, {pipeline_mode = #tpu.pipeline_mode<synchronous>, transform_indices = @transform_1, window_bounds = array<i64: 2, 140, 72>}, {pipeline_mode = #tpu.pipeline_mode<synchronous>, transform_indices = @transform_2, window_bounds = array<i64: 1, 72>}, {pipeline_mode = #tpu.pipeline_mode<synchronous>, transform_indices = @transform_3, window_bounds = array<i64: 2, 5, 72, 64>}, {pipeline_mode = #tpu.pipeline_mode<synchronous>, transform_indices = @transform_4, window_bounds = array<i64: 1, 64>}, {pipeline_mode = #tpu.pipeline_mode<synchronous>, transform_indices = @transform_5, window_bounds = array<i64: 4, 64, 128>}, {pipeline_mode = #tpu.pipeline_mode<synchronous>, transform_indices = @transform_6, window_bounds = array<i64: 1, 128>}, {pipeline_mode = #tpu.pipeline_mode<synchronous>, transform_indices = @transform_7, window_bounds = array<i64: 128, 128>}, {pipeline_mode = #tpu.pipeline_mode<synchronous>, transform_indices = @transform_8, window_bounds = array<i64: 1, 128>}, {pipeline_mode = #tpu.pipeline_mode<synchronous>, transform_indices = @transform_9, window_bounds = array<i64: 128, 128>}, {pipeline_mode = #tpu.pipeline_mode<synchronous>, transform_indices = @transform_10, window_bounds = array<i64: 1, 128>}, {transform_indices = @transform_11, window_bounds = array<i64: 8, 128>}]} {
    %c0 = arith.constant 0 : index
    %c0_0 = arith.constant 0 : index
    %c0_1 = arith.constant 0 : index
    %0 = vector.load %arg2[%c0, %c0_0, %c0_1] : memref<2x140x72xf32, #tpu.memory_space<vmem>>, vector<1x140x72xf32>
    %1 = vector.shape_cast %0 : vector<1x140x72xf32> to vector<140x72xf32>
    %c1 = arith.constant 1 : index
    %c0_2 = arith.constant 0 : index
    %c0_3 = arith.constant 0 : index
    %2 = vector.load %arg2[%c1, %c0_2, %c0_3] : memref<2x140x72xf32, #tpu.memory_space<vmem>>, vector<1x140x72xf32>
    %3 = vector.shape_cast %2 : vector<1x140x72xf32> to vector<140x72xf32>
    %c0_4 = arith.constant 0 : index
    %c0_5 = arith.constant 0 : index
    %c0_6 = arith.constant 0 : index
    %c0_7 = arith.constant 0 : index
    %4 = vector.load %arg1[%c0_4, %c0_5, %c0_6, %c0_7] : memref<1x2x96x140xf32, #tpu.memory_space<vmem>>, vector<1x1x96x140xf32>
    %5 = vector.shape_cast %4 : vector<1x1x96x140xf32> to vector<96x140xf32>
    %cst = arith.constant dense<0.000000e+00> : vector<96x72xf32>
    %6 = tpu.matmul %5, %1, %cst {dimension_numbers = #tpu.dot_dimension_numbers<[1], [0], [0], [1], [0, 0, 1, 1], [], []>} : vector<96x140xf32>, vector<140x72xf32>, vector<96x72xf32> -> vector<96x72xf32>
    %cst_8 = arith.constant dense<0.000000e+00> : vector<96x72xf32>
    %7 = tpu.matmul %5, %3, %cst_8 {dimension_numbers = #tpu.dot_dimension_numbers<[1], [0], [0], [1], [0, 0, 1, 1], [], []>} : vector<96x140xf32>, vector<140x72xf32>, vector<96x72xf32> -> vector<96x72xf32>
    %8 = arith.maximumf %6, %7 : vector<96x72xf32>
    %c0_9 = arith.constant 0 : index
    %c1_10 = arith.constant 1 : index
    %c0_11 = arith.constant 0 : index
    %c0_12 = arith.constant 0 : index
    %9 = vector.load %arg1[%c0_9, %c1_10, %c0_11, %c0_12] : memref<1x2x96x140xf32, #tpu.memory_space<vmem>>, vector<1x1x96x140xf32>
    %10 = vector.shape_cast %9 : vector<1x1x96x140xf32> to vector<96x140xf32>
    %cst_13 = arith.constant dense<0.000000e+00> : vector<96x72xf32>
    %11 = tpu.matmul %10, %1, %cst_13 {dimension_numbers = #tpu.dot_dimension_numbers<[1], [0], [0], [1], [0, 0, 1, 1], [], []>} : vector<96x140xf32>, vector<140x72xf32>, vector<96x72xf32> -> vector<96x72xf32>
    %12 = arith.maximumf %8, %11 : vector<96x72xf32>
    %cst_14 = arith.constant dense<0.000000e+00> : vector<96x72xf32>
    %13 = tpu.matmul %10, %3, %cst_14 {dimension_numbers = #tpu.dot_dimension_numbers<[1], [0], [0], [1], [0, 0, 1, 1], [], []>} : vector<96x140xf32>, vector<140x72xf32>, vector<96x72xf32> -> vector<96x72xf32>
    %14 = arith.maximumf %12, %13 : vector<96x72xf32>
    %c0_15 = arith.constant 0 : index
    %c0_16 = arith.constant 0 : index
    %15 = vector.load %arg3[%c0_15, %c0_16] : memref<1x72xf32, #tpu.memory_space<vmem>>, vector<1x72xf32>
    %16 = vector.broadcast %15 : vector<1x72xf32> to vector<96x72xf32>
    %17 = arith.addf %14, %16 : vector<96x72xf32>
    %cst_17 = arith.constant 0.000000e+00 : f32
    %18 = vector.broadcast %cst_17 : f32 to vector<96x72xf32>
    %19 = arith.maximumf %17, %18 : vector<96x72xf32>
    %cst_18 = arith.constant 0.000000e+00 : f32
    %20 = vector.broadcast %cst_18 : f32 to vector<64x64xf32>
    %cst_19 = arith.constant 0.000000e+00 : f32
    %21 = vector.broadcast %cst_19 : f32 to vector<64x64xf32>
    %22 = vector.extract_strided_slice %19 {offsets = [0, 0], sizes = [64, 72], strides = [1, 1]} : vector<96x72xf32> to vector<64x72xf32>
    %c0_20 = arith.constant 0 : index
    %c0_21 = arith.constant 0 : index
    %c0_22 = arith.constant 0 : index
    %c0_23 = arith.constant 0 : index
    %23 = vector.load %arg4[%c0_20, %c0_21, %c0_22, %c0_23] : memref<2x5x72x64xf32, #tpu.memory_space<vmem>>, vector<1x1x72x64xf32>
    %24 = vector.shape_cast %23 : vector<1x1x72x64xf32> to vector<72x64xf32>
    %cst_24 = arith.constant dense<0.000000e+00> : vector<64x64xf32>
    %25 = tpu.matmul %22, %24, %cst_24 {dimension_numbers = #tpu.dot_dimension_numbers<[1], [0], [0], [1], [0, 0, 1, 1], [], []>} : vector<64x72xf32>, vector<72x64xf32>, vector<64x64xf32> -> vector<64x64xf32>
    %26 = arith.addf %20, %25 : vector<64x64xf32>
    %c1_25 = arith.constant 1 : index
    %c0_26 = arith.constant 0 : index
    %c0_27 = arith.constant 0 : index
    %c0_28 = arith.constant 0 : index
    %27 = vector.load %arg4[%c1_25, %c0_26, %c0_27, %c0_28] : memref<2x5x72x64xf32, #tpu.memory_space<vmem>>, vector<1x1x72x64xf32>
    %28 = vector.shape_cast %27 : vector<1x1x72x64xf32> to vector<72x64xf32>
    %cst_29 = arith.constant dense<0.000000e+00> : vector<64x64xf32>
    %29 = tpu.matmul %22, %28, %cst_29 {dimension_numbers = #tpu.dot_dimension_numbers<[1], [0], [0], [1], [0, 0, 1, 1], [], []>} : vector<64x72xf32>, vector<72x64xf32>, vector<64x64xf32> -> vector<64x64xf32>
    %30 = arith.addf %21, %29 : vector<64x64xf32>
    %31 = vector.extract_strided_slice %19 {offsets = [8, 0], sizes = [64, 72], strides = [1, 1]} : vector<96x72xf32> to vector<64x72xf32>
    %c0_30 = arith.constant 0 : index
    %c1_31 = arith.constant 1 : index
    %c0_32 = arith.constant 0 : index
    %c0_33 = arith.constant 0 : index
    %32 = vector.load %arg4[%c0_30, %c1_31, %c0_32, %c0_33] : memref<2x5x72x64xf32, #tpu.memory_space<vmem>>, vector<1x1x72x64xf32>
    %33 = vector.shape_cast %32 : vector<1x1x72x64xf32> to vector<72x64xf32>
    %cst_34 = arith.constant dense<0.000000e+00> : vector<64x64xf32>
    %34 = tpu.matmul %31, %33, %cst_34 {dimension_numbers = #tpu.dot_dimension_numbers<[1], [0], [0], [1], [0, 0, 1, 1], [], []>} : vector<64x72xf32>, vector<72x64xf32>, vector<64x64xf32> -> vector<64x64xf32>
    %35 = arith.addf %26, %34 : vector<64x64xf32>
    %c1_35 = arith.constant 1 : index
    %c1_36 = arith.constant 1 : index
    %c0_37 = arith.constant 0 : index
    %c0_38 = arith.constant 0 : index
    %36 = vector.load %arg4[%c1_35, %c1_36, %c0_37, %c0_38] : memref<2x5x72x64xf32, #tpu.memory_space<vmem>>, vector<1x1x72x64xf32>
    %37 = vector.shape_cast %36 : vector<1x1x72x64xf32> to vector<72x64xf32>
    %cst_39 = arith.constant dense<0.000000e+00> : vector<64x64xf32>
    %38 = tpu.matmul %31, %37, %cst_39 {dimension_numbers = #tpu.dot_dimension_numbers<[1], [0], [0], [1], [0, 0, 1, 1], [], []>} : vector<64x72xf32>, vector<72x64xf32>, vector<64x64xf32> -> vector<64x64xf32>
    %39 = arith.addf %30, %38 : vector<64x64xf32>
    %40 = vector.extract_strided_slice %19 {offsets = [16, 0], sizes = [64, 72], strides = [1, 1]} : vector<96x72xf32> to vector<64x72xf32>
    %c0_40 = arith.constant 0 : index
    %c2 = arith.constant 2 : index
    %c0_41 = arith.constant 0 : index
    %c0_42 = arith.constant 0 : index
    %41 = vector.load %arg4[%c0_40, %c2, %c0_41, %c0_42] : memref<2x5x72x64xf32, #tpu.memory_space<vmem>>, vector<1x1x72x64xf32>
    %42 = vector.shape_cast %41 : vector<1x1x72x64xf32> to vector<72x64xf32>
    %cst_43 = arith.constant dense<0.000000e+00> : vector<64x64xf32>
    %43 = tpu.matmul %40, %42, %cst_43 {dimension_numbers = #tpu.dot_dimension_numbers<[1], [0], [0], [1], [0, 0, 1, 1], [], []>} : vector<64x72xf32>, vector<72x64xf32>, vector<64x64xf32> -> vector<64x64xf32>
    %44 = arith.addf %35, %43 : vector<64x64xf32>
    %c1_44 = arith.constant 1 : index
    %c2_45 = arith.constant 2 : index
    %c0_46 = arith.constant 0 : index
    %c0_47 = arith.constant 0 : index
    %45 = vector.load %arg4[%c1_44, %c2_45, %c0_46, %c0_47] : memref<2x5x72x64xf32, #tpu.memory_space<vmem>>, vector<1x1x72x64xf32>
    %46 = vector.shape_cast %45 : vector<1x1x72x64xf32> to vector<72x64xf32>
    %cst_48 = arith.constant dense<0.000000e+00> : vector<64x64xf32>
    %47 = tpu.matmul %40, %46, %cst_48 {dimension_numbers = #tpu.dot_dimension_numbers<[1], [0], [0], [1], [0, 0, 1, 1], [], []>} : vector<64x72xf32>, vector<72x64xf32>, vector<64x64xf32> -> vector<64x64xf32>
    %48 = arith.addf %39, %47 : vector<64x64xf32>
    %49 = vector.extract_strided_slice %19 {offsets = [24, 0], sizes = [64, 72], strides = [1, 1]} : vector<96x72xf32> to vector<64x72xf32>
    %c0_49 = arith.constant 0 : index
    %c3 = arith.constant 3 : index
    %c0_50 = arith.constant 0 : index
    %c0_51 = arith.constant 0 : index
    %50 = vector.load %arg4[%c0_49, %c3, %c0_50, %c0_51] : memref<2x5x72x64xf32, #tpu.memory_space<vmem>>, vector<1x1x72x64xf32>
    %51 = vector.shape_cast %50 : vector<1x1x72x64xf32> to vector<72x64xf32>
    %cst_52 = arith.constant dense<0.000000e+00> : vector<64x64xf32>
    %52 = tpu.matmul %49, %51, %cst_52 {dimension_numbers = #tpu.dot_dimension_numbers<[1], [0], [0], [1], [0, 0, 1, 1], [], []>} : vector<64x72xf32>, vector<72x64xf32>, vector<64x64xf32> -> vector<64x64xf32>
    %53 = arith.addf %44, %52 : vector<64x64xf32>
    %c1_53 = arith.constant 1 : index
    %c3_54 = arith.constant 3 : index
    %c0_55 = arith.constant 0 : index
    %c0_56 = arith.constant 0 : index
    %54 = vector.load %arg4[%c1_53, %c3_54, %c0_55, %c0_56] : memref<2x5x72x64xf32, #tpu.memory_space<vmem>>, vector<1x1x72x64xf32>
    %55 = vector.shape_cast %54 : vector<1x1x72x64xf32> to vector<72x64xf32>
    %cst_57 = arith.constant dense<0.000000e+00> : vector<64x64xf32>
    %56 = tpu.matmul %49, %55, %cst_57 {dimension_numbers = #tpu.dot_dimension_numbers<[1], [0], [0], [1], [0, 0, 1, 1], [], []>} : vector<64x72xf32>, vector<72x64xf32>, vector<64x64xf32> -> vector<64x64xf32>
    %57 = arith.addf %48, %56 : vector<64x64xf32>
    %58 = vector.extract_strided_slice %19 {offsets = [32, 0], sizes = [64, 72], strides = [1, 1]} : vector<96x72xf32> to vector<64x72xf32>
    %c0_58 = arith.constant 0 : index
    %c4 = arith.constant 4 : index
    %c0_59 = arith.constant 0 : index
    %c0_60 = arith.constant 0 : index
    %59 = vector.load %arg4[%c0_58, %c4, %c0_59, %c0_60] : memref<2x5x72x64xf32, #tpu.memory_space<vmem>>, vector<1x1x72x64xf32>
    %60 = vector.shape_cast %59 : vector<1x1x72x64xf32> to vector<72x64xf32>
    %cst_61 = arith.constant dense<0.000000e+00> : vector<64x64xf32>
    %61 = tpu.matmul %58, %60, %cst_61 {dimension_numbers = #tpu.dot_dimension_numbers<[1], [0], [0], [1], [0, 0, 1, 1], [], []>} : vector<64x72xf32>, vector<72x64xf32>, vector<64x64xf32> -> vector<64x64xf32>
    %62 = arith.addf %53, %61 : vector<64x64xf32>
    %c1_62 = arith.constant 1 : index
    %c4_63 = arith.constant 4 : index
    %c0_64 = arith.constant 0 : index
    %c0_65 = arith.constant 0 : index
    %63 = vector.load %arg4[%c1_62, %c4_63, %c0_64, %c0_65] : memref<2x5x72x64xf32, #tpu.memory_space<vmem>>, vector<1x1x72x64xf32>
    %64 = vector.shape_cast %63 : vector<1x1x72x64xf32> to vector<72x64xf32>
    %cst_66 = arith.constant dense<0.000000e+00> : vector<64x64xf32>
    %65 = tpu.matmul %58, %64, %cst_66 {dimension_numbers = #tpu.dot_dimension_numbers<[1], [0], [0], [1], [0, 0, 1, 1], [], []>} : vector<64x72xf32>, vector<72x64xf32>, vector<64x64xf32> -> vector<64x64xf32>
    %66 = arith.addf %57, %65 : vector<64x64xf32>
    %67 = arith.maximumf %62, %66 : vector<64x64xf32>
    %cst_67 = arith.constant 0.000000e+00 : f32
    %68 = vector.broadcast %cst_67 : f32 to vector<8x128xf32>
    %69 = vector.extract_strided_slice %67 {offsets = [0, 0], sizes = [8, 64], strides = [1, 1]} : vector<64x64xf32> to vector<8x64xf32>
    %70 = vector.extract_strided_slice %67 {offsets = [8, 0], sizes = [8, 64], strides = [1, 1]} : vector<64x64xf32> to vector<8x64xf32>
    %71 = arith.maximumf %69, %70 : vector<8x64xf32>
    %c0_68 = arith.constant 0 : index
    %c0_69 = arith.constant 0 : index
    %72 = vector.load %arg5[%c0_68, %c0_69] : memref<1x64xf32, #tpu.memory_space<vmem>>, vector<1x64xf32>
    %73 = vector.broadcast %72 : vector<1x64xf32> to vector<8x64xf32>
    %74 = arith.addf %71, %73 : vector<8x64xf32>
    %cst_70 = arith.constant 0.000000e+00 : f32
    %75 = vector.broadcast %cst_70 : f32 to vector<8x64xf32>
    %76 = arith.maximumf %74, %75 : vector<8x64xf32>
    %c0_71 = arith.constant 0 : index
    %c0_72 = arith.constant 0 : index
    %c0_73 = arith.constant 0 : index
    %77 = vector.load %arg6[%c0_71, %c0_72, %c0_73] : memref<4x64x128xf32, #tpu.memory_space<vmem>>, vector<1x64x128xf32>
    %78 = vector.shape_cast %77 : vector<1x64x128xf32> to vector<64x128xf32>
    %cst_74 = arith.constant dense<0.000000e+00> : vector<8x128xf32>
    %79 = tpu.matmul %76, %78, %cst_74 {dimension_numbers = #tpu.dot_dimension_numbers<[1], [0], [0], [1], [0, 0, 1, 1], [], []>} : vector<8x64xf32>, vector<64x128xf32>, vector<8x128xf32> -> vector<8x128xf32>
    %80 = arith.addf %68, %79 : vector<8x128xf32>
    %81 = vector.extract_strided_slice %67 {offsets = [16, 0], sizes = [8, 64], strides = [1, 1]} : vector<64x64xf32> to vector<8x64xf32>
    %82 = vector.extract_strided_slice %67 {offsets = [24, 0], sizes = [8, 64], strides = [1, 1]} : vector<64x64xf32> to vector<8x64xf32>
    %83 = arith.maximumf %81, %82 : vector<8x64xf32>
    %c0_75 = arith.constant 0 : index
    %c0_76 = arith.constant 0 : index
    %84 = vector.load %arg5[%c0_75, %c0_76] : memref<1x64xf32, #tpu.memory_space<vmem>>, vector<1x64xf32>
    %85 = vector.broadcast %84 : vector<1x64xf32> to vector<8x64xf32>
    %86 = arith.addf %83, %85 : vector<8x64xf32>
    %cst_77 = arith.constant 0.000000e+00 : f32
    %87 = vector.broadcast %cst_77 : f32 to vector<8x64xf32>
    %88 = arith.maximumf %86, %87 : vector<8x64xf32>
    %c1_78 = arith.constant 1 : index
    %c0_79 = arith.constant 0 : index
    %c0_80 = arith.constant 0 : index
    %89 = vector.load %arg6[%c1_78, %c0_79, %c0_80] : memref<4x64x128xf32, #tpu.memory_space<vmem>>, vector<1x64x128xf32>
    %90 = vector.shape_cast %89 : vector<1x64x128xf32> to vector<64x128xf32>
    %cst_81 = arith.constant dense<0.000000e+00> : vector<8x128xf32>
    %91 = tpu.matmul %88, %90, %cst_81 {dimension_numbers = #tpu.dot_dimension_numbers<[1], [0], [0], [1], [0, 0, 1, 1], [], []>} : vector<8x64xf32>, vector<64x128xf32>, vector<8x128xf32> -> vector<8x128xf32>
    %92 = arith.addf %80, %91 : vector<8x128xf32>
    %93 = vector.extract_strided_slice %67 {offsets = [32, 0], sizes = [8, 64], strides = [1, 1]} : vector<64x64xf32> to vector<8x64xf32>
    %94 = vector.extract_strided_slice %67 {offsets = [40, 0], sizes = [8, 64], strides = [1, 1]} : vector<64x64xf32> to vector<8x64xf32>
    %95 = arith.maximumf %93, %94 : vector<8x64xf32>
    %c0_82 = arith.constant 0 : index
    %c0_83 = arith.constant 0 : index
    %96 = vector.load %arg5[%c0_82, %c0_83] : memref<1x64xf32, #tpu.memory_space<vmem>>, vector<1x64xf32>
    %97 = vector.broadcast %96 : vector<1x64xf32> to vector<8x64xf32>
    %98 = arith.addf %95, %97 : vector<8x64xf32>
    %cst_84 = arith.constant 0.000000e+00 : f32
    %99 = vector.broadcast %cst_84 : f32 to vector<8x64xf32>
    %100 = arith.maximumf %98, %99 : vector<8x64xf32>
    %c2_85 = arith.constant 2 : index
    %c0_86 = arith.constant 0 : index
    %c0_87 = arith.constant 0 : index
    %101 = vector.load %arg6[%c2_85, %c0_86, %c0_87] : memref<4x64x128xf32, #tpu.memory_space<vmem>>, vector<1x64x128xf32>
    %102 = vector.shape_cast %101 : vector<1x64x128xf32> to vector<64x128xf32>
    %cst_88 = arith.constant dense<0.000000e+00> : vector<8x128xf32>
    %103 = tpu.matmul %100, %102, %cst_88 {dimension_numbers = #tpu.dot_dimension_numbers<[1], [0], [0], [1], [0, 0, 1, 1], [], []>} : vector<8x64xf32>, vector<64x128xf32>, vector<8x128xf32> -> vector<8x128xf32>
    %104 = arith.addf %92, %103 : vector<8x128xf32>
    %105 = vector.extract_strided_slice %67 {offsets = [48, 0], sizes = [8, 64], strides = [1, 1]} : vector<64x64xf32> to vector<8x64xf32>
    %106 = vector.extract_strided_slice %67 {offsets = [56, 0], sizes = [8, 64], strides = [1, 1]} : vector<64x64xf32> to vector<8x64xf32>
    %107 = arith.maximumf %105, %106 : vector<8x64xf32>
    %c0_89 = arith.constant 0 : index
    %c0_90 = arith.constant 0 : index
    %108 = vector.load %arg5[%c0_89, %c0_90] : memref<1x64xf32, #tpu.memory_space<vmem>>, vector<1x64xf32>
    %109 = vector.broadcast %108 : vector<1x64xf32> to vector<8x64xf32>
    %110 = arith.addf %107, %109 : vector<8x64xf32>
    %cst_91 = arith.constant 0.000000e+00 : f32
    %111 = vector.broadcast %cst_91 : f32 to vector<8x64xf32>
    %112 = arith.maximumf %110, %111 : vector<8x64xf32>
    %c3_92 = arith.constant 3 : index
    %c0_93 = arith.constant 0 : index
    %c0_94 = arith.constant 0 : index
    %113 = vector.load %arg6[%c3_92, %c0_93, %c0_94] : memref<4x64x128xf32, #tpu.memory_space<vmem>>, vector<1x64x128xf32>
    %114 = vector.shape_cast %113 : vector<1x64x128xf32> to vector<64x128xf32>
    %cst_95 = arith.constant dense<0.000000e+00> : vector<8x128xf32>
    %115 = tpu.matmul %112, %114, %cst_95 {dimension_numbers = #tpu.dot_dimension_numbers<[1], [0], [0], [1], [0, 0, 1, 1], [], []>} : vector<8x64xf32>, vector<64x128xf32>, vector<8x128xf32> -> vector<8x128xf32>
    %116 = arith.addf %104, %115 : vector<8x128xf32>
    %c0_96 = arith.constant 0 : index
    %c0_97 = arith.constant 0 : index
    %117 = vector.load %arg7[%c0_96, %c0_97] : memref<1x128xf32, #tpu.memory_space<vmem>>, vector<1x128xf32>
    %118 = vector.broadcast %117 : vector<1x128xf32> to vector<8x128xf32>
    %119 = arith.addf %116, %118 : vector<8x128xf32>
    %cst_98 = arith.constant 0.000000e+00 : f32
    %120 = vector.broadcast %cst_98 : f32 to vector<8x128xf32>
    %121 = arith.maximumf %119, %120 : vector<8x128xf32>
    %c0_99 = arith.constant 0 : index
    %c0_100 = arith.constant 0 : index
    %122 = vector.load %arg8[%c0_99, %c0_100] : memref<128x128xf32, #tpu.memory_space<vmem>>, vector<128x128xf32>
    %cst_101 = arith.constant dense<0.000000e+00> : vector<8x128xf32>
    %123 = tpu.matmul %121, %122, %cst_101 {dimension_numbers = #tpu.dot_dimension_numbers<[1], [0], [0], [1], [0, 0, 1, 1], [], []>} : vector<8x128xf32>, vector<128x128xf32>, vector<8x128xf32> -> vector<8x128xf32>
    %c0_102 = arith.constant 0 : index
    %c0_103 = arith.constant 0 : index
    %124 = vector.load %arg9[%c0_102, %c0_103] : memref<1x128xf32, #tpu.memory_space<vmem>>, vector<1x128xf32>
    %125 = vector.broadcast %124 : vector<1x128xf32> to vector<8x128xf32>
    %126 = arith.addf %123, %125 : vector<8x128xf32>
    %cst_104 = arith.constant 0.000000e+00 : f32
    %127 = vector.broadcast %cst_104 : f32 to vector<8x128xf32>
    %128 = arith.maximumf %126, %127 : vector<8x128xf32>
    %c0_105 = arith.constant 0 : index
    %c0_106 = arith.constant 0 : index
    %129 = vector.load %arg10[%c0_105, %c0_106] : memref<128x128xf32, #tpu.memory_space<vmem>>, vector<128x128xf32>
    %cst_107 = arith.constant dense<0.000000e+00> : vector<8x128xf32>
    %130 = tpu.matmul %128, %129, %cst_107 {dimension_numbers = #tpu.dot_dimension_numbers<[1], [0], [0], [1], [0, 0, 1, 1], [], []>} : vector<8x128xf32>, vector<128x128xf32>, vector<8x128xf32> -> vector<8x128xf32>
    %c0_108 = arith.constant 0 : index
    %c0_109 = arith.constant 0 : index
    %131 = vector.load %arg11[%c0_108, %c0_109] : memref<1x128xf32, #tpu.memory_space<vmem>>, vector<1x128xf32>
    %132 = vector.broadcast %131 : vector<1x128xf32> to vector<8x128xf32>
    %133 = arith.addf %130, %132 : vector<8x128xf32>
    %c0_110 = arith.constant 0 : index
    %c0_111 = arith.constant 0 : index
    %134 = vector.load %arg12[%c0_110, %c0_111] : memref<8x128xf32, #tpu.memory_space<vmem>>, vector<8x128xf32>
    tpu.vector_store %arg12[%c0_110, %c0_111], %133 {strides = array<i32>} : memref<8x128xf32, #tpu.memory_space<vmem>>, vector<8x128xf32>,
    return
  }
  func.func @transform_0(%arg0: i32) -> (i32, i32, i32, i32) {
    %c0_i32 = arith.constant 0 : i32
    %c0_i32_0 = arith.constant 0 : i32
    %c0_i32_1 = arith.constant 0 : i32
    %c0_i32_2 = arith.constant 0 : i32
    return %arg0, %c0_i32, %c0_i32_0, %c0_i32_1 : i32, i32, i32, i32
  }
  func.func @transform_1(%arg0: i32) -> (i32, i32, i32) {
    %c0_i32 = arith.constant 0 : i32
    %c0_i32_0 = arith.constant 0 : i32
    %c0_i32_1 = arith.constant 0 : i32
    %c0_i32_2 = arith.constant 0 : i32
    return %c0_i32, %c0_i32_0, %c0_i32_1 : i32, i32, i32
  }
  func.func @transform_2(%arg0: i32) -> (i32, i32) {
    %c0_i32 = arith.constant 0 : i32
    %c0_i32_0 = arith.constant 0 : i32
    %c0_i32_1 = arith.constant 0 : i32
    return %c0_i32, %c0_i32_0 : i32, i32
  }
  func.func @transform_3(%arg0: i32) -> (i32, i32, i32, i32) {
    %c0_i32 = arith.constant 0 : i32
    %c0_i32_0 = arith.constant 0 : i32
    %c0_i32_1 = arith.constant 0 : i32
    %c0_i32_2 = arith.constant 0 : i32
    %c0_i32_3 = arith.constant 0 : i32
    return %c0_i32, %c0_i32_0, %c0_i32_1, %c0_i32_2 : i32, i32, i32, i32
  }
  func.func @transform_4(%arg0: i32) -> (i32, i32) {
    %c0_i32 = arith.constant 0 : i32
    %c0_i32_0 = arith.constant 0 : i32
    %c0_i32_1 = arith.constant 0 : i32
    return %c0_i32, %c0_i32_0 : i32, i32
  }
  func.func @transform_5(%arg0: i32) -> (i32, i32, i32) {
    %c0_i32 = arith.constant 0 : i32
    %c0_i32_0 = arith.constant 0 : i32
    %c0_i32_1 = arith.constant 0 : i32
    %c0_i32_2 = arith.constant 0 : i32
    return %c0_i32, %c0_i32_0, %c0_i32_1 : i32, i32, i32
  }
  func.func @transform_6(%arg0: i32) -> (i32, i32) {
    %c0_i32 = arith.constant 0 : i32
    %c0_i32_0 = arith.constant 0 : i32
    %c0_i32_1 = arith.constant 0 : i32
    return %c0_i32, %c0_i32_0 : i32, i32
  }
  func.func @transform_7(%arg0: i32) -> (i32, i32) {
    %c0_i32 = arith.constant 0 : i32
    %c0_i32_0 = arith.constant 0 : i32
    %c0_i32_1 = arith.constant 0 : i32
    return %c0_i32, %c0_i32_0 : i32, i32
  }
  func.func @transform_8(%arg0: i32) -> (i32, i32) {
    %c0_i32 = arith.constant 0 : i32
    %c0_i32_0 = arith.constant 0 : i32
    %c0_i32_1 = arith.constant 0 : i32
    return %c0_i32, %c0_i32_0 : i32, i32
  }
  func.func @transform_9(%arg0: i32) -> (i32, i32) {
    %c0_i32 = arith.constant 0 : i32
    %c0_i32_0 = arith.constant 0 : i32
    %c0_i32_1 = arith.constant 0 : i32
    return %c0_i32, %c0_i32_0 : i32, i32
  }
  func.func @transform_10(%arg0: i32) -> (i32, i32) {
    %c0_i32 = arith.constant 0 : i32
    %c0_i32_0 = arith.constant 0 : i32
    %c0_i32_1 = arith.constant 0 : i32
    return %c0_i32, %c0_i32_0 : i32, i32
  }
  func.func @transform_11(%arg0: i32) -> (i32, i32) {
    %c0_i32 = arith.constant 0 : i32
    %c0_i32_0 = arith.constant 0 : i32
    return %arg0, %c0_i32 : i32, i32
  }
}

</mosaic_0001>

<llo_original>
// kernel: lenet_forward.1
$region0: #{lenet_forward.1}
  #allocation0 [shape = 'u32[]', space=smem, size = 0x4, offset = 0x4, fixed_abs, tag = 'smem constant byte address 0x4 - core index']
  #allocation1 [shape = 'u32[72,128]{1,0:T(1,128)}', space=vmem, size = 0x9000, scoped, tag = 'internal scratch']
  %s0 = inlined_call_operand.vmem [shape: f32[1,2,96,140], index: 0, kind: input, shape index: {}]
  %s1 = inlined_call_operand.vmem [shape: f32[2,140,72], index: 1, kind: input, shape index: {}]
  %s2 = inlined_call_operand.vmem [shape: f32[1,72], index: 2, kind: input, shape index: {}]
  %s3 = inlined_call_operand.vmem [shape: f32[2,5,72,64], index: 3, kind: input, shape index: {}]
  %s4 = inlined_call_operand.vmem [shape: f32[1,64], index: 4, kind: input, shape index: {}]
  %s5 = inlined_call_operand.vmem [shape: f32[4,64,128], index: 5, kind: input, shape index: {}]
  %s6 = inlined_call_operand.vmem [shape: f32[1,128], index: 6, kind: input, shape index: {}]
  %s7 = inlined_call_operand.vmem [shape: f32[128,128], index: 7, kind: input, shape index: {}]
  %s8 = inlined_call_operand.vmem [shape: f32[1,128], index: 8, kind: input, shape index: {}]
  %s9 = inlined_call_operand.vmem [shape: f32[128,128], index: 9, kind: input, shape index: {}]
  %s10 = inlined_call_operand.vmem [shape: f32[1,128], index: 10, kind: input, shape index: {}]
  %s11 = inlined_call_operand.vmem [shape: f32[8,128], index: 11, kind: output, shape index: {}]
  %s12 = sld [smem:[#allocation0]]
  $region54: #{lenet_forward.1} parent=0
    _
  %s14 = ssub.s32 1, %s12
  %s15 = scalar_select 0, %s14, %s12
  // Predicated region
  $region2: #{lenet_forward.1} parent=0 // pred_check
    _
  $region3: #{lenet_forward.1} parent=0 // pred_check_branch
    %17 = sbr.rel (0) target = $region5
  $region4: #{lenet_forward.1} parent=0 // pred_region
    _
  $region5: #{lenet_forward.1} parent=0 // pred_fallthru
    _
  // Predicated region
  $region6: #{lenet_forward.1} parent=0 // pred_check
    _
  $region7: #{lenet_forward.1} parent=0 // pred_check_branch
    %19 = sbr.rel (0) target = $region9
  $region8: #{lenet_forward.1} parent=0 // pred_region
    _
  $region9: #{lenet_forward.1} parent=0 // pred_fallthru
    _
  // Predicated region
  $region10: #{lenet_forward.1} parent=0 // pred_check
    _
  $region11: #{lenet_forward.1} parent=0 // pred_check_branch
    %21 = sbr.rel (0) target = $region13
  $region12: #{lenet_forward.1} parent=0 // pred_region
    _
  $region13: #{lenet_forward.1} parent=0 // pred_fallthru
    _
  // Predicated region
  $region14: #{lenet_forward.1} parent=0 // pred_check
    _
  $region15: #{lenet_forward.1} parent=0 // pred_check_branch
    %23 = sbr.rel (0) target = $region17
  $region16: #{lenet_forward.1} parent=0 // pred_region
    _
  $region17: #{lenet_forward.1} parent=0 // pred_fallthru
    _
  // Predicated region
  $region18: #{lenet_forward.1} parent=0 // pred_check
    _
  $region19: #{lenet_forward.1} parent=0 // pred_check_branch
    %25 = sbr.rel (0) target = $region21
  $region20: #{lenet_forward.1} parent=0 // pred_region
    _
  $region21: #{lenet_forward.1} parent=0 // pred_fallthru
    _
  // Predicated region
  $region22: #{lenet_forward.1} parent=0 // pred_check
    _
  $region23: #{lenet_forward.1} parent=0 // pred_check_branch
    %27 = sbr.rel (0) target = $region25
  $region24: #{lenet_forward.1} parent=0 // pred_region
    _
  $region25: #{lenet_forward.1} parent=0 // pred_fallthru
    _
  // Predicated region
  $region26: #{lenet_forward.1} parent=0 // pred_check
    _
  $region27: #{lenet_forward.1} parent=0 // pred_check_branch
    %29 = sbr.rel (0) target = $region29
  $region28: #{lenet_forward.1} parent=0 // pred_region
    _
  $region29: #{lenet_forward.1} parent=0 // pred_fallthru
    _
  // Predicated region
  $region30: #{lenet_forward.1} parent=0 // pred_check
    _
  $region31: #{lenet_forward.1} parent=0 // pred_check_branch
    %31 = sbr.rel (0) target = $region33
  $region32: #{lenet_forward.1} parent=0 // pred_region
    _
  $region33: #{lenet_forward.1} parent=0 // pred_fallthru
    _
  // Predicated region
  $region34: #{lenet_forward.1} parent=0 // pred_check
    _
  $region35: #{lenet_forward.1} parent=0 // pred_check_branch
    %33 = sbr.rel (0) target = $region37
  $region36: #{lenet_forward.1} parent=0 // pred_region
    _
  $region37: #{lenet_forward.1} parent=0 // pred_fallthru
    _
  // Predicated region
  $region38: #{lenet_forward.1} parent=0 // pred_check
    _
  $region39: #{lenet_forward.1} parent=0 // pred_check_branch
    %35 = sbr.rel (0) target = $region41
  $region40: #{lenet_forward.1} parent=0 // pred_region
    _
  $region41: #{lenet_forward.1} parent=0 // pred_fallthru
    _
  // Predicated region
  $region42: #{lenet_forward.1} parent=0 // pred_check
    _
  $region43: #{lenet_forward.1} parent=0 // pred_check_branch
    %37 = sbr.rel (0) target = $region45
  $region44: #{lenet_forward.1} parent=0 // pred_region
    _
  $region45: #{lenet_forward.1} parent=0 // pred_fallthru
    _
  %v38 = vld [vmem:[%s1] sm:$0xff]
  %v39 = vld [vmem:[%s1 + $0x8] sm:$0xff]
  %v40 = vld [vmem:[%s1 + $0x10] sm:$0xff]
  %v41 = vld [vmem:[%s1 + $0x18] sm:$0xff]
  %v42 = vld [vmem:[%s1 + $0x20] sm:$0xff]
  %v43 = vld [vmem:[%s1 + $0x28] sm:$0xff]
  %v44 = vld [vmem:[%s1 + $0x30] sm:$0xff]
  %v45 = vld [vmem:[%s1 + $0x38] sm:$0xff]
  %v46 = vld [vmem:[%s1 + $0x40] sm:$0xff]
  %v47 = vld [vmem:[%s1 + $0x48] sm:$0xff]
  %v48 = vld [vmem:[%s1 + $0x50] sm:$0xff]
  %v49 = vld [vmem:[%s1 + $0x58] sm:$0xff]
  %v50 = vld [vmem:[%s1 + $0x60] sm:$0xff]
  %v51 = vld [vmem:[%s1 + $0x68] sm:$0xff]
  %v52 = vld [vmem:[%s1 + $0x70] sm:$0xff]
  %v53 = vld [vmem:[%s1 + $0x78] sm:$0xff]
  %v54 = vld [vmem:[%s1 + $0x80] sm:$0xff]
  %v55 = vld [vmem:[%s1 + $0x88] sm:$0xf]
  %s56 = scalar_lea.vmem %s1, 144
  %v57 = vld [vmem:[%s56] sm:$0xff]
  %v58 = vld [vmem:[%s56 + $0x8] sm:$0xff]
  %v59 = vld [vmem:[%s56 + $0x10] sm:$0xff]
  %v60 = vld [vmem:[%s56 + $0x18] sm:$0xff]
  %v61 = vld [vmem:[%s56 + $0x20] sm:$0xff]
  %v62 = vld [vmem:[%s56 + $0x28] sm:$0xff]
  %v63 = vld [vmem:[%s56 + $0x30] sm:$0xff]
  %v64 = vld [vmem:[%s56 + $0x38] sm:$0xff]
  %v65 = vld [vmem:[%s56 + $0x40] sm:$0xff]
  %v66 = vld [vmem:[%s56 + $0x48] sm:$0xff]
  %v67 = vld [vmem:[%s56 + $0x50] sm:$0xff]
  %v68 = vld [vmem:[%s56 + $0x58] sm:$0xff]
  %v69 = vld [vmem:[%s56 + $0x60] sm:$0xff]
  %v70 = vld [vmem:[%s56 + $0x68] sm:$0xff]
  %v71 = vld [vmem:[%s56 + $0x70] sm:$0xff]
  %v72 = vld [vmem:[%s56 + $0x78] sm:$0xff]
  %v73 = vld [vmem:[%s56 + $0x80] sm:$0xff]
  %v74 = vld [vmem:[%s56 + $0x88] sm:$0xf]
  %v75 = vld [vmem:[%s0] sm:$0xff]
  %v76 = vld [vmem:[%s0 + $0x8] sm:$0xff]
  %v77 = vld [vmem:[%s0 + $0x10] sm:$0xff]
  %v78 = vld [vmem:[%s0 + $0x18] sm:$0xff]
  %v79 = vld [vmem:[%s0 + $0x20] sm:$0xff]
  %v80 = vld [vmem:[%s0 + $0x28] sm:$0xff]
  %v81 = vld [vmem:[%s0 + $0x30] sm:$0xff]
  %v82 = vld [vmem:[%s0 + $0x38] sm:$0xff]
  %v83 = vld [vmem:[%s0 + $0x40] sm:$0xff]
  %v84 = vld [vmem:[%s0 + $0x48] sm:$0xff]
  %v85 = vld [vmem:[%s0 + $0x50] sm:$0xff]
  %v86 = vld [vmem:[%s0 + $0x58] sm:$0xff]
  %v87 = vld [vmem:[%s0 + $0x60] sm:$0xff]
  %v88 = vld [vmem:[%s0 + $0x68] sm:$0xff]
  %v89 = vld [vmem:[%s0 + $0x70] sm:$0xff]
  %v90 = vld [vmem:[%s0 + $0x78] sm:$0xff]
  %v91 = vld [vmem:[%s0 + $0x80] sm:$0xff]
  %v92 = vld [vmem:[%s0 + $0x88] sm:$0xff]
  %v93 = vld [vmem:[%s0 + $0x90] sm:$0xff]
  %v94 = vld [vmem:[%s0 + $0x98] sm:$0xff]
  %v95 = vld [vmem:[%s0 + $0xa0] sm:$0xff]
  %v96 = vld [vmem:[%s0 + $0xa8] sm:$0xff]
  %v97 = vld [vmem:[%s0 + $0xb0] sm:$0xff]
  %v98 = vld [vmem:[%s0 + $0xb8] sm:$0xff]
  %vm99 = vcmask 97280
  %v101 = vsel %vm99, %v76, 0
  %v104 = vsel %vm99, %v78, 0
  %v107 = vsel %vm99, %v80, 0
  %v110 = vsel %vm99, %v82, 0
  %v113 = vsel %vm99, %v84, 0
  %v116 = vsel %vm99, %v86, 0
  %v119 = vsel %vm99, %v88, 0
  %v122 = vsel %vm99, %v90, 0
  %v125 = vsel %vm99, %v92, 0
  %v128 = vsel %vm99, %v94, 0
  %v131 = vsel %vm99, %v96, 0
  %v134 = vsel %vm99, %v98, 0
  %vm136 = vcmask 1043456
  %v138 = vsel %vm136, %v55, 0
  %140 = vmatpush.msra.mxu0 %v53
  %141 = vmatpush.msra.mxu0 %v52
  %142 = vmatpush.msra.mxu0 %v51
  %143 = vmatpush.msra.mxu0 %v50
  %144 = vmatpush.msra.mxu0 %v49
  %145 = vmatpush.msra.mxu0 %v48
  %146 = vmatpush.msra.mxu0 %v47
  %147 = vmatpush.msra.mxu0 %v46
  %148 = vmatpush.msra.mxu0 %v45
  %149 = vmatpush.msra.mxu0 %v44
  %150 = vmatpush.msra.mxu0 %v43
  %151 = vmatpush.msra.mxu0 %v42
  %152 = vmatpush.msra.mxu0 %v41
  %153 = vmatpush.msra.mxu0 %v40
  %154 = vmatpush.msra.mxu0 %v39
  %155 = vmatpush.msra.mxu0 %v38
  %156 = vmatmul.f32.gmra.mxu0 %v75
  %v157 = vpop.f32.mrf.mxu0
  %v158 = vadd.f32 0.0, %v157
  %159 = vmatmul.f32.gmra.mxu0 %v77
  %v160 = vpop.f32.mrf.mxu0
  %v161 = vadd.f32 0.0, %v160
  %162 = vmatmul.f32.gmra.mxu0 %v79
  %v163 = vpop.f32.mrf.mxu0
  %v164 = vadd.f32 0.0, %v163
  %165 = vmatmul.f32.gmra.mxu0 %v81
  %v166 = vpop.f32.mrf.mxu0
  %v167 = vadd.f32 0.0, %v166
  %168 = vmatmul.f32.gmra.mxu0 %v83
  %v169 = vpop.f32.mrf.mxu0
  %v170 = vadd.f32 0.0, %v169
  %171 = vmatmul.f32.gmra.mxu0 %v85
  %v172 = vpop.f32.mrf.mxu0
  %v173 = vadd.f32 0.0, %v172
  %174 = vmatmul.f32.gmra.mxu0 %v87
  %v175 = vpop.f32.mrf.mxu0
  %v176 = vadd.f32 0.0, %v175
  %177 = vmatmul.f32.gmra.mxu0 %v89
  %v178 = vpop.f32.mrf.mxu0
  %v179 = vadd.f32 0.0, %v178
  %180 = vmatmul.f32.gmra.mxu0 %v91
  %v181 = vpop.f32.mrf.mxu0
  %v182 = vadd.f32 0.0, %v181
  %183 = vmatmul.f32.gmra.mxu0 %v93
  %v184 = vpop.f32.mrf.mxu0
  %v185 = vadd.f32 0.0, %v184
  %186 = vmatmul.f32.gmra.mxu0 %v95
  %v187 = vpop.f32.mrf.mxu0
  %v188 = vadd.f32 0.0, %v187
  %189 = vmatmul.f32.gmra.mxu0 %v97
  %v190 = vpop.f32.mrf.mxu0
  %v191 = vadd.f32 0.0, %v190
  %192 = vdwg.mxu0
  %193 = vmatpush.msra.mxu0 0.0
  %194 = vmatpush.msra.mxu0 0.0
  %195 = vmatpush.msra.mxu0 0.0
  %196 = vmatpush.msra.mxu0 0.0
  %197 = vmatpush.msra.mxu0 0.0
  %198 = vmatpush.msra.mxu0 0.0
  %199 = vmatpush.msra.mxu0 0.0
  %200 = vmatpush.msra.mxu0 0.0
  %201 = vmatpush.msra.mxu0 0.0
  %202 = vmatpush.msra.mxu0 0.0
  %203 = vmatpush.msra.mxu0 0.0
  %204 = vmatpush.msra.mxu0 0.0
  %205 = vmatpush.msra.mxu0 0.0
  %206 = vmatpush.msra.mxu0 0.0
  %207 = vmatpush.msra.mxu0 %v138
  %208 = vmatpush.msra.mxu0 %v54
  %209 = vmatmul.f32.gmra.mxu0 %v101
  %v210 = vpop.f32.mrf.mxu0
  %v211 = vadd.f32 %v158, %v210
  %212 = vmatmul.f32.gmra.mxu0 %v104
  %v213 = vpop.f32.mrf.mxu0
  %v214 = vadd.f32 %v161, %v213
  %215 = vmatmul.f32.gmra.mxu0 %v107
  %v216 = vpop.f32.mrf.mxu0
  %v217 = vadd.f32 %v164, %v216
  %218 = vmatmul.f32.gmra.mxu0 %v110
  %v219 = vpop.f32.mrf.mxu0
  %v220 = vadd.f32 %v167, %v219
  %221 = vmatmul.f32.gmra.mxu0 %v113
  %v222 = vpop.f32.mrf.mxu0
  %v223 = vadd.f32 %v170, %v222
  %224 = vmatmul.f32.gmra.mxu0 %v116
  %v225 = vpop.f32.mrf.mxu0
  %v226 = vadd.f32 %v173, %v225
  %227 = vmatmul.f32.gmra.mxu0 %v119
  %v228 = vpop.f32.mrf.mxu0
  %v229 = vadd.f32 %v176, %v228
  %230 = vmatmul.f32.gmra.mxu0 %v122
  %v231 = vpop.f32.mrf.mxu0
  %v232 = vadd.f32 %v179, %v231
  %233 = vmatmul.f32.gmra.mxu0 %v125
  %v234 = vpop.f32.mrf.mxu0
  %v235 = vadd.f32 %v182, %v234
  %236 = vmatmul.f32.gmra.mxu0 %v128
  %v237 = vpop.f32.mrf.mxu0
  %v238 = vadd.f32 %v185, %v237
  %239 = vmatmul.f32.gmra.mxu0 %v131
  %v240 = vpop.f32.mrf.mxu0
  %v241 = vadd.f32 %v188, %v240
  %242 = vmatmul.f32.gmra.mxu0 %v134
  %v243 = vpop.f32.mrf.mxu0
  %v244 = vadd.f32 %v191, %v243
  %245 = vdwg.mxu0
  %v247 = vsel %vm136, %v74, 0
  %249 = vmatpush.msra.mxu0 %v72
  %250 = vmatpush.msra.mxu0 %v71
  %251 = vmatpush.msra.mxu0 %v70
  %252 = vmatpush.msra.mxu0 %v69
  %253 = vmatpush.msra.mxu0 %v68
  %254 = vmatpush.msra.mxu0 %v67
  %255 = vmatpush.msra.mxu0 %v66
  %256 = vmatpush.msra.mxu0 %v65
  %257 = vmatpush.msra.mxu0 %v64
  %258 = vmatpush.msra.mxu0 %v63
  %259 = vmatpush.msra.mxu0 %v62
  %260 = vmatpush.msra.mxu0 %v61
  %261 = vmatpush.msra.mxu0 %v60
  %262 = vmatpush.msra.mxu0 %v59
  %263 = vmatpush.msra.mxu0 %v58
  %264 = vmatpush.msra.mxu0 %v57
  %265 = vmatmul.f32.gmra.mxu0 %v75
  %v266 = vpop.f32.mrf.mxu0
  %v267 = vadd.f32 0.0, %v266
  %268 = vmatmul.f32.gmra.mxu0 %v77
  %v269 = vpop.f32.mrf.mxu0
  %v270 = vadd.f32 0.0, %v269
  %271 = vmatmul.f32.gmra.mxu0 %v79
  %v272 = vpop.f32.mrf.mxu0
  %v273 = vadd.f32 0.0, %v272
  %274 = vmatmul.f32.gmra.mxu0 %v81
  %v275 = vpop.f32.mrf.mxu0
  %v276 = vadd.f32 0.0, %v275
  %277 = vmatmul.f32.gmra.mxu0 %v83
  %v278 = vpop.f32.mrf.mxu0
  %v279 = vadd.f32 0.0, %v278
  %280 = vmatmul.f32.gmra.mxu0 %v85
  %v281 = vpop.f32.mrf.mxu0
  %v282 = vadd.f32 0.0, %v281
  %283 = vmatmul.f32.gmra.mxu0 %v87
  %v284 = vpop.f32.mrf.mxu0
  %v285 = vadd.f32 0.0, %v284
  %286 = vmatmul.f32.gmra.mxu0 %v89
  %v287 = vpop.f32.mrf.mxu0
  %v288 = vadd.f32 0.0, %v287
  %289 = vmatmul.f32.gmra.mxu0 %v91
  %v290 = vpop.f32.mrf.mxu0
  %v291 = vadd.f32 0.0, %v290
  %292 = vmatmul.f32.gmra.mxu0 %v93
  %v293 = vpop.f32.mrf.mxu0
  %v294 = vadd.f32 0.0, %v293
  %295 = vmatmul.f32.gmra.mxu0 %v95
  %v296 = vpop.f32.mrf.mxu0
  %v297 = vadd.f32 0.0, %v296
  %298 = vmatmul.f32.gmra.mxu0 %v97
  %v299 = vpop.f32.mrf.mxu0
  %v300 = vadd.f32 0.0, %v299
  %301 = vdwg.mxu0
  %302 = vmatpush.msra.mxu0 0.0
  %303 = vmatpush.msra.mxu0 0.0
  %304 = vmatpush.msra.mxu0 0.0
  %305 = vmatpush.msra.mxu0 0.0
  %306 = vmatpush.msra.mxu0 0.0
  %307 = vmatpush.msra.mxu0 0.0
  %308 = vmatpush.msra.mxu0 0.0
  %309 = vmatpush.msra.mxu0 0.0
  %310 = vmatpush.msra.mxu0 0.0
  %311 = vmatpush.msra.mxu0 0.0
  %312 = vmatpush.msra.mxu0 0.0
  %313 = vmatpush.msra.mxu0 0.0
  %314 = vmatpush.msra.mxu0 0.0
  %315 = vmatpush.msra.mxu0 0.0
  %316 = vmatpush.msra.mxu0 %v247
  %317 = vmatpush.msra.mxu0 %v73
  %318 = vmatmul.f32.gmra.mxu0 %v101
  %v319 = vpop.f32.mrf.mxu0
  %v320 = vadd.f32 %v267, %v319
  %321 = vmatmul.f32.gmra.mxu0 %v104
  %v322 = vpop.f32.mrf.mxu0
  %v323 = vadd.f32 %v270, %v322
  %324 = vmatmul.f32.gmra.mxu0 %v107
  %v325 = vpop.f32.mrf.mxu0
  %v326 = vadd.f32 %v273, %v325
  %327 = vmatmul.f32.gmra.mxu0 %v110
  %v328 = vpop.f32.mrf.mxu0
  %v329 = vadd.f32 %v276, %v328
  %330 = vmatmul.f32.gmra.mxu0 %v113
  %v331 = vpop.f32.mrf.mxu0
  %v332 = vadd.f32 %v279, %v331
  %333 = vmatmul.f32.gmra.mxu0 %v116
  %v334 = vpop.f32.mrf.mxu0
  %v335 = vadd.f32 %v282, %v334
  %336 = vmatmul.f32.gmra.mxu0 %v119
  %v337 = vpop.f32.mrf.mxu0
  %v338 = vadd.f32 %v285, %v337
  %339 = vmatmul.f32.gmra.mxu0 %v122
  %v340 = vpop.f32.mrf.mxu0
  %v341 = vadd.f32 %v288, %v340
  %342 = vmatmul.f32.gmra.mxu0 %v125
  %v343 = vpop.f32.mrf.mxu0
  %v344 = vadd.f32 %v291, %v343
  %345 = vmatmul.f32.gmra.mxu0 %v128
  %v346 = vpop.f32.mrf.mxu0
  %v347 = vadd.f32 %v294, %v346
  %348 = vmatmul.f32.gmra.mxu0 %v131
  %v349 = vpop.f32.mrf.mxu0
  %v350 = vadd.f32 %v297, %v349
  %351 = vmatmul.f32.gmra.mxu0 %v134
  %v352 = vpop.f32.mrf.mxu0
  %v353 = vadd.f32 %v300, %v352
  %354 = vdwg.mxu0
  %v355 = vmax.f32 %v211, %v320
  %v356 = vmax.f32 %v214, %v323
  %v357 = vmax.f32 %v217, %v326
  %v358 = vmax.f32 %v220, %v329
  %v359 = vmax.f32 %v223, %v332
  %v360 = vmax.f32 %v226, %v335
  %v361 = vmax.f32 %v229, %v338
  %v362 = vmax.f32 %v232, %v341
  %v363 = vmax.f32 %v235, %v344
  %v364 = vmax.f32 %v238, %v347
  %v365 = vmax.f32 %v241, %v350
  %v366 = vmax.f32 %v244, %v353
  %s367 = scalar_lea.vmem %s0, 192
  %v368 = vld [vmem:[%s367] sm:$0xff]
  %v369 = vld [vmem:[%s367 + $0x8] sm:$0xff]
  %v370 = vld [vmem:[%s367 + $0x10] sm:$0xff]
  %v371 = vld [vmem:[%s367 + $0x18] sm:$0xff]
  %v372 = vld [vmem:[%s367 + $0x20] sm:$0xff]
  %v373 = vld [vmem:[%s367 + $0x28] sm:$0xff]
  %v374 = vld [vmem:[%s367 + $0x30] sm:$0xff]
  %v375 = vld [vmem:[%s367 + $0x38] sm:$0xff]
  %v376 = vld [vmem:[%s367 + $0x40] sm:$0xff]
  %v377 = vld [vmem:[%s367 + $0x48] sm:$0xff]
  %v378 = vld [vmem:[%s367 + $0x50] sm:$0xff]
  %v379 = vld [vmem:[%s367 + $0x58] sm:$0xff]
  %v380 = vld [vmem:[%s367 + $0x60] sm:$0xff]
  %v381 = vld [vmem:[%s367 + $0x68] sm:$0xff]
  %v382 = vld [vmem:[%s367 + $0x70] sm:$0xff]
  %v383 = vld [vmem:[%s367 + $0x78] sm:$0xff]
  %v384 = vld [vmem:[%s367 + $0x80] sm:$0xff]
  %v385 = vld [vmem:[%s367 + $0x88] sm:$0xff]
  %v386 = vld [vmem:[%s367 + $0x90] sm:$0xff]
  %v387 = vld [vmem:[%s367 + $0x98] sm:$0xff]
  %v388 = vld [vmem:[%s367 + $0xa0] sm:$0xff]
  %v389 = vld [vmem:[%s367 + $0xa8] sm:$0xff]
  %v390 = vld [vmem:[%s367 + $0xb0] sm:$0xff]
  %v391 = vld [vmem:[%s367 + $0xb8] sm:$0xff]
  %v393 = vsel %vm99, %v369, 0
  %v396 = vsel %vm99, %v371, 0
  %v399 = vsel %vm99, %v373, 0
  %v402 = vsel %vm99, %v375, 0
  %v405 = vsel %vm99, %v377, 0
  %v408 = vsel %vm99, %v379, 0
  %v411 = vsel %vm99, %v381, 0
  %v414 = vsel %vm99, %v383, 0
  %v417 = vsel %vm99, %v385, 0
  %v420 = vsel %vm99, %v387, 0
  %v423 = vsel %vm99, %v389, 0
  %v426 = vsel %vm99, %v391, 0
  %428 = vmatpush.msra.mxu0 %v53
  %429 = vmatpush.msra.mxu0 %v52
  %430 = vmatpush.msra.mxu0 %v51
  %431 = vmatpush.msra.mxu0 %v50
  %432 = vmatpush.msra.mxu0 %v49
  %433 = vmatpush.msra.mxu0 %v48
  %434 = vmatpush.msra.mxu0 %v47
  %435 = vmatpush.msra.mxu0 %v46
  %436 = vmatpush.msra.mxu0 %v45
  %437 = vmatpush.msra.mxu0 %v44
  %438 = vmatpush.msra.mxu0 %v43
  %439 = vmatpush.msra.mxu0 %v42
  %440 = vmatpush.msra.mxu0 %v41
  %441 = vmatpush.msra.mxu0 %v40
  %442 = vmatpush.msra.mxu0 %v39
  %443 = vmatpush.msra.mxu0 %v38
  %444 = vmatmul.f32.gmra.mxu0 %v368
  %v445 = vpop.f32.mrf.mxu0
  %v446 = vadd.f32 0.0, %v445
  %447 = vmatmul.f32.gmra.mxu0 %v370
  %v448 = vpop.f32.mrf.mxu0
  %v449 = vadd.f32 0.0, %v448
  %450 = vmatmul.f32.gmra.mxu0 %v372
  %v451 = vpop.f32.mrf.mxu0
  %v452 = vadd.f32 0.0, %v451
  %453 = vmatmul.f32.gmra.mxu0 %v374
  %v454 = vpop.f32.mrf.mxu0
  %v455 = vadd.f32 0.0, %v454
  %456 = vmatmul.f32.gmra.mxu0 %v376
  %v457 = vpop.f32.mrf.mxu0
  %v458 = vadd.f32 0.0, %v457
  %459 = vmatmul.f32.gmra.mxu0 %v378
  %v460 = vpop.f32.mrf.mxu0
  %v461 = vadd.f32 0.0, %v460
  %462 = vmatmul.f32.gmra.mxu0 %v380
  %v463 = vpop.f32.mrf.mxu0
  %v464 = vadd.f32 0.0, %v463
  %465 = vmatmul.f32.gmra.mxu0 %v382
  %v466 = vpop.f32.mrf.mxu0
  %v467 = vadd.f32 0.0, %v466
  %468 = vmatmul.f32.gmra.mxu0 %v384
  %v469 = vpop.f32.mrf.mxu0
  %v470 = vadd.f32 0.0, %v469
  %471 = vmatmul.f32.gmra.mxu0 %v386
  %v472 = vpop.f32.mrf.mxu0
  %v473 = vadd.f32 0.0, %v472
  %474 = vmatmul.f32.gmra.mxu0 %v388
  %v475 = vpop.f32.mrf.mxu0
  %v476 = vadd.f32 0.0, %v475
  %477 = vmatmul.f32.gmra.mxu0 %v390
  %v478 = vpop.f32.mrf.mxu0
  %v479 = vadd.f32 0.0, %v478
  %480 = vdwg.mxu0
  %481 = vmatpush.msra.mxu0 0.0
  %482 = vmatpush.msra.mxu0 0.0
  %483 = vmatpush.msra.mxu0 0.0
  %484 = vmatpush.msra.mxu0 0.0
  %485 = vmatpush.msra.mxu0 0.0
  %486 = vmatpush.msra.mxu0 0.0
  %487 = vmatpush.msra.mxu0 0.0
  %488 = vmatpush.msra.mxu0 0.0
  %489 = vmatpush.msra.mxu0 0.0
  %490 = vmatpush.msra.mxu0 0.0
  %491 = vmatpush.msra.mxu0 0.0
  %492 = vmatpush.msra.mxu0 0.0
  %493 = vmatpush.msra.mxu0 0.0
  %494 = vmatpush.msra.mxu0 0.0
  %495 = vmatpush.msra.mxu0 %v138
  %496 = vmatpush.msra.mxu0 %v54
  %497 = vmatmul.f32.gmra.mxu0 %v393
  %v498 = vpop.f32.mrf.mxu0
  %v499 = vadd.f32 %v446, %v498
  %500 = vmatmul.f32.gmra.mxu0 %v396
  %v501 = vpop.f32.mrf.mxu0
  %v502 = vadd.f32 %v449, %v501
  %503 = vmatmul.f32.gmra.mxu0 %v399
  %v504 = vpop.f32.mrf.mxu0
  %v505 = vadd.f32 %v452, %v504
  %506 = vmatmul.f32.gmra.mxu0 %v402
  %v507 = vpop.f32.mrf.mxu0
  %v508 = vadd.f32 %v455, %v507
  %509 = vmatmul.f32.gmra.mxu0 %v405
  %v510 = vpop.f32.mrf.mxu0
  %v511 = vadd.f32 %v458, %v510
  %512 = vmatmul.f32.gmra.mxu0 %v408
  %v513 = vpop.f32.mrf.mxu0
  %v514 = vadd.f32 %v461, %v513
  %515 = vmatmul.f32.gmra.mxu0 %v411
  %v516 = vpop.f32.mrf.mxu0
  %v517 = vadd.f32 %v464, %v516
  %518 = vmatmul.f32.gmra.mxu0 %v414
  %v519 = vpop.f32.mrf.mxu0
  %v520 = vadd.f32 %v467, %v519
  %521 = vmatmul.f32.gmra.mxu0 %v417
  %v522 = vpop.f32.mrf.mxu0
  %v523 = vadd.f32 %v470, %v522
  %524 = vmatmul.f32.gmra.mxu0 %v420
  %v525 = vpop.f32.mrf.mxu0
  %v526 = vadd.f32 %v473, %v525
  %527 = vmatmul.f32.gmra.mxu0 %v423
  %v528 = vpop.f32.mrf.mxu0
  %v529 = vadd.f32 %v476, %v528
  %530 = vmatmul.f32.gmra.mxu0 %v426
  %v531 = vpop.f32.mrf.mxu0
  %v532 = vadd.f32 %v479, %v531
  %533 = vdwg.mxu0
  %v534 = vmax.f32 %v355, %v499
  %v535 = vmax.f32 %v356, %v502
  %v536 = vmax.f32 %v357, %v505
  %v537 = vmax.f32 %v358, %v508
  %v538 = vmax.f32 %v359, %v511
  %v539 = vmax.f32 %v360, %v514
  %v540 = vmax.f32 %v361, %v517
  %v541 = vmax.f32 %v362, %v520
  %v542 = vmax.f32 %v363, %v523
  %v543 = vmax.f32 %v364, %v526
  %v544 = vmax.f32 %v365, %v529
  %v545 = vmax.f32 %v366, %v532
  %546 = vmatpush.msra.mxu0 %v72
  %547 = vmatpush.msra.mxu0 %v71
  %548 = vmatpush.msra.mxu0 %v70
  %549 = vmatpush.msra.mxu0 %v69
  %550 = vmatpush.msra.mxu0 %v68
  %551 = vmatpush.msra.mxu0 %v67
  %552 = vmatpush.msra.mxu0 %v66
  %553 = vmatpush.msra.mxu0 %v65
  %554 = vmatpush.msra.mxu0 %v64
  %555 = vmatpush.msra.mxu0 %v63
  %556 = vmatpush.msra.mxu0 %v62
  %557 = vmatpush.msra.mxu0 %v61
  %558 = vmatpush.msra.mxu0 %v60
  %559 = vmatpush.msra.mxu0 %v59
  %560 = vmatpush.msra.mxu0 %v58
  %561 = vmatpush.msra.mxu0 %v57
  %562 = vmatmul.f32.gmra.mxu0 %v368
  %v563 = vpop.f32.mrf.mxu0
  %v564 = vadd.f32 0.0, %v563
  %565 = vmatmul.f32.gmra.mxu0 %v370
  %v566 = vpop.f32.mrf.mxu0
  %v567 = vadd.f32 0.0, %v566
  %568 = vmatmul.f32.gmra.mxu0 %v372
  %v569 = vpop.f32.mrf.mxu0
  %v570 = vadd.f32 0.0, %v569
  %571 = vmatmul.f32.gmra.mxu0 %v374
  %v572 = vpop.f32.mrf.mxu0
  %v573 = vadd.f32 0.0, %v572
  %574 = vmatmul.f32.gmra.mxu0 %v376
  %v575 = vpop.f32.mrf.mxu0
  %v576 = vadd.f32 0.0, %v575
  %577 = vmatmul.f32.gmra.mxu0 %v378
  %v578 = vpop.f32.mrf.mxu0
  %v579 = vadd.f32 0.0, %v578
  %580 = vmatmul.f32.gmra.mxu0 %v380
  %v581 = vpop.f32.mrf.mxu0
  %v582 = vadd.f32 0.0, %v581
  %583 = vmatmul.f32.gmra.mxu0 %v382
  %v584 = vpop.f32.mrf.mxu0
  %v585 = vadd.f32 0.0, %v584
  %586 = vmatmul.f32.gmra.mxu0 %v384
  %v587 = vpop.f32.mrf.mxu0
  %v588 = vadd.f32 0.0, %v587
  %589 = vmatmul.f32.gmra.mxu0 %v386
  %v590 = vpop.f32.mrf.mxu0
  %v591 = vadd.f32 0.0, %v590
  %592 = vmatmul.f32.gmra.mxu0 %v388
  %v593 = vpop.f32.mrf.mxu0
  %v594 = vadd.f32 0.0, %v593
  %595 = vmatmul.f32.gmra.mxu0 %v390
  %v596 = vpop.f32.mrf.mxu0
  %v597 = vadd.f32 0.0, %v596
  %598 = vdwg.mxu0
  %599 = vmatpush.msra.mxu0 0.0
  %600 = vmatpush.msra.mxu0 0.0
  %601 = vmatpush.msra.mxu0 0.0
  %602 = vmatpush.msra.mxu0 0.0
  %603 = vmatpush.msra.mxu0 0.0
  %604 = vmatpush.msra.mxu0 0.0
  %605 = vmatpush.msra.mxu0 0.0
  %606 = vmatpush.msra.mxu0 0.0
  %607 = vmatpush.msra.mxu0 0.0
  %608 = vmatpush.msra.mxu0 0.0
  %609 = vmatpush.msra.mxu0 0.0
  %610 = vmatpush.msra.mxu0 0.0
  %611 = vmatpush.msra.mxu0 0.0
  %612 = vmatpush.msra.mxu0 0.0
  %613 = vmatpush.msra.mxu0 %v247
  %614 = vmatpush.msra.mxu0 %v73
  %615 = vmatmul.f32.gmra.mxu0 %v393
  %v616 = vpop.f32.mrf.mxu0
  %v617 = vadd.f32 %v564, %v616
  %618 = vmatmul.f32.gmra.mxu0 %v396
  %v619 = vpop.f32.mrf.mxu0
  %v620 = vadd.f32 %v567, %v619
  %621 = vmatmul.f32.gmra.mxu0 %v399
  %v622 = vpop.f32.mrf.mxu0
  %v623 = vadd.f32 %v570, %v622
  %624 = vmatmul.f32.gmra.mxu0 %v402
  %v625 = vpop.f32.mrf.mxu0
  %v626 = vadd.f32 %v573, %v625
  %627 = vmatmul.f32.gmra.mxu0 %v405
  %v628 = vpop.f32.mrf.mxu0
  %v629 = vadd.f32 %v576, %v628
  %630 = vmatmul.f32.gmra.mxu0 %v408
  %v631 = vpop.f32.mrf.mxu0
  %v632 = vadd.f32 %v579, %v631
  %633 = vmatmul.f32.gmra.mxu0 %v411
  %v634 = vpop.f32.mrf.mxu0
  %v635 = vadd.f32 %v582, %v634
  %636 = vmatmul.f32.gmra.mxu0 %v414
  %v637 = vpop.f32.mrf.mxu0
  %v638 = vadd.f32 %v585, %v637
  %639 = vmatmul.f32.gmra.mxu0 %v417
  %v640 = vpop.f32.mrf.mxu0
  %v641 = vadd.f32 %v588, %v640
  %642 = vmatmul.f32.gmra.mxu0 %v420
  %v643 = vpop.f32.mrf.mxu0
  %v644 = vadd.f32 %v591, %v643
  %645 = vmatmul.f32.gmra.mxu0 %v423
  %v646 = vpop.f32.mrf.mxu0
  %v647 = vadd.f32 %v594, %v646
  %648 = vmatmul.f32.gmra.mxu0 %v426
  %v649 = vpop.f32.mrf.mxu0
  %v650 = vadd.f32 %v597, %v649
  %651 = vdwg.mxu0
  %v652 = vmax.f32 %v534, %v617
  %v653 = vmax.f32 %v535, %v620
  %v654 = vmax.f32 %v536, %v623
  %v655 = vmax.f32 %v537, %v626
  %v656 = vmax.f32 %v538, %v629
  %v657 = vmax.f32 %v539, %v632
  %v658 = vmax.f32 %v540, %v635
  %v659 = vmax.f32 %v541, %v638
  %v660 = vmax.f32 %v542, %v641
  %v661 = vmax.f32 %v543, %v644
  %v662 = vmax.f32 %v544, %v647
  %v663 = vmax.f32 %v545, %v650
  %v664 = vld [vmem:[%s2] sm:$0x1]
  %v666 = vperm.slane %v664, 0
  %v668 = vadd.f32 %v652, %v666
  %v669 = vadd.f32 %v653, %v666
  %v670 = vadd.f32 %v654, %v666
  %v671 = vadd.f32 %v655, %v666
  %v672 = vadd.f32 %v656, %v666
  %v673 = vadd.f32 %v657, %v666
  %v674 = vadd.f32 %v658, %v666
  %v675 = vadd.f32 %v659, %v666
  %v676 = vadd.f32 %v660, %v666
  %v677 = vadd.f32 %v661, %v666
  %v678 = vadd.f32 %v662, %v666
  %v679 = vadd.f32 %v663, %v666
  %v680 = vmax.f32 %v668, 0.0
  %v681 = vmax.f32 %v669, 0.0
  %v682 = vmax.f32 %v670, 0.0
  %v683 = vmax.f32 %v671, 0.0
  %v684 = vmax.f32 %v672, 0.0
  %v685 = vmax.f32 %v673, 0.0
  %v686 = vmax.f32 %v674, 0.0
  %v687 = vmax.f32 %v675, 0.0
  %v688 = vmax.f32 %v676, 0.0
  %v689 = vmax.f32 %v677, 0.0
  %v690 = vmax.f32 %v678, 0.0
  %v691 = vmax.f32 %v679, 0.0
  %v692 = vld [vmem:[%s3] sm:$0xff]
  %v693 = vld [vmem:[%s3 + $0x8] sm:$0xff]
  %v694 = vld [vmem:[%s3 + $0x10] sm:$0xff]
  %v695 = vld [vmem:[%s3 + $0x18] sm:$0xff]
  %v696 = vld [vmem:[%s3 + $0x20] sm:$0xff]
  %v697 = vld [vmem:[%s3 + $0x28] sm:$0xff]
  %v698 = vld [vmem:[%s3 + $0x30] sm:$0xff]
  %v699 = vld [vmem:[%s3 + $0x38] sm:$0xff]
  %v700 = vld [vmem:[%s3 + $0x40] sm:$0xff]
  %s701 = scalar_lea.vmem %s3, 360
  %v702 = vld [vmem:[%s701] sm:$0xff]
  %v703 = vld [vmem:[%s701 + $0x8] sm:$0xff]
  %v704 = vld [vmem:[%s701 + $0x10] sm:$0xff]
  %v705 = vld [vmem:[%s701 + $0x18] sm:$0xff]
  %v706 = vld [vmem:[%s701 + $0x20] sm:$0xff]
  %v707 = vld [vmem:[%s701 + $0x28] sm:$0xff]
  %v708 = vld [vmem:[%s701 + $0x30] sm:$0xff]
  %v709 = vld [vmem:[%s701 + $0x38] sm:$0xff]
  %v710 = vld [vmem:[%s701 + $0x40] sm:$0xff]
  %s711 = scalar_lea.vmem %s3, 72
  %v712 = vld [vmem:[%s711] sm:$0xff]
  %v713 = vld [vmem:[%s711 + $0x8] sm:$0xff]
  %v714 = vld [vmem:[%s711 + $0x10] sm:$0xff]
  %v715 = vld [vmem:[%s711 + $0x18] sm:$0xff]
  %v716 = vld [vmem:[%s711 + $0x20] sm:$0xff]
  %v717 = vld [vmem:[%s711 + $0x28] sm:$0xff]
  %v718 = vld [vmem:[%s711 + $0x30] sm:$0xff]
  %v719 = vld [vmem:[%s711 + $0x38] sm:$0xff]
  %v720 = vld [vmem:[%s711 + $0x40] sm:$0xff]
  %vm721 = vcmask 588800
  %v723 = vsel %vm721, %v681, 0
  %v726 = vsel %vm721, %v682, 0
  %v729 = vsel %vm721, %v683, 0
  %v732 = vsel %vm721, %v684, 0
  %v735 = vsel %vm721, %v685, 0
  %v738 = vsel %vm721, %v686, 0
  %v741 = vsel %vm721, %v687, 0
  %v744 = vsel %vm721, %v688, 0
  %746 = vmatpush.msra.mxu0 0.0
  %747 = vmatpush.msra.mxu0 0.0
  %748 = vmatpush.msra.mxu0 0.0
  %749 = vmatpush.msra.mxu0 0.0
  %750 = vmatpush.msra.mxu0 0.0
  %751 = vmatpush.msra.mxu0 0.0
  %752 = vmatpush.msra.mxu0 0.0
  %753 = vmatpush.msra.mxu0 %v720
  %754 = vmatpush.msra.mxu0 %v719
  %755 = vmatpush.msra.mxu0 %v718
  %756 = vmatpush.msra.mxu0 %v717
  %757 = vmatpush.msra.mxu0 %v716
  %758 = vmatpush.msra.mxu0 %v715
  %759 = vmatpush.msra.mxu0 %v714
  %760 = vmatpush.msra.mxu0 %v713
  %761 = vmatpush.msra.mxu0 %v712
  %762 = vmatmul.f32.gmra.mxu0 %v723
  %v763 = vpop.f32.mrf.mxu0
  %v764 = vadd.f32 0.0, %v763
  %765 = vmatmul.f32.gmra.mxu0 %v726
  %v766 = vpop.f32.mrf.mxu0
  %v767 = vadd.f32 0.0, %v766
  %768 = vmatmul.f32.gmra.mxu0 %v729
  %v769 = vpop.f32.mrf.mxu0
  %v770 = vadd.f32 0.0, %v769
  %771 = vmatmul.f32.gmra.mxu0 %v732
  %v772 = vpop.f32.mrf.mxu0
  %v773 = vadd.f32 0.0, %v772
  %774 = vmatmul.f32.gmra.mxu0 %v735
  %v775 = vpop.f32.mrf.mxu0
  %v776 = vadd.f32 0.0, %v775
  %777 = vmatmul.f32.gmra.mxu0 %v738
  %v778 = vpop.f32.mrf.mxu0
  %v779 = vadd.f32 0.0, %v778
  %780 = vmatmul.f32.gmra.mxu0 %v741
  %v781 = vpop.f32.mrf.mxu0
  %v782 = vadd.f32 0.0, %v781
  %783 = vmatmul.f32.gmra.mxu0 %v744
  %v784 = vpop.f32.mrf.mxu0
  %v785 = vadd.f32 0.0, %v784
  %786 = vdwg.mxu0
  %v788 = vsel %vm721, %v680, 0
  %790 = vmatpush.msra.mxu0 0.0
  %791 = vmatpush.msra.mxu0 0.0
  %792 = vmatpush.msra.mxu0 0.0
  %793 = vmatpush.msra.mxu0 0.0
  %794 = vmatpush.msra.mxu0 0.0
  %795 = vmatpush.msra.mxu0 0.0
  %796 = vmatpush.msra.mxu0 0.0
  %797 = vmatpush.msra.mxu0 %v700
  %798 = vmatpush.msra.mxu0 %v699
  %799 = vmatpush.msra.mxu0 %v698
  %800 = vmatpush.msra.mxu0 %v697
  %801 = vmatpush.msra.mxu0 %v696
  %802 = vmatpush.msra.mxu0 %v695
  %803 = vmatpush.msra.mxu0 %v694
  %804 = vmatpush.msra.mxu0 %v693
  %805 = vmatpush.msra.mxu0 %v692
  %806 = vmatmul.f32.gmra.mxu0 %v788
  %v807 = vpop.f32.mrf.mxu0
  %v808 = vadd.f32 %v764, %v807
  %809 = vmatmul.f32.gmra.mxu0 %v723
  %v810 = vpop.f32.mrf.mxu0
  %v811 = vadd.f32 %v767, %v810
  %812 = vmatmul.f32.gmra.mxu0 %v726
  %v813 = vpop.f32.mrf.mxu0
  %v814 = vadd.f32 %v770, %v813
  %815 = vmatmul.f32.gmra.mxu0 %v729
  %v816 = vpop.f32.mrf.mxu0
  %v817 = vadd.f32 %v773, %v816
  %818 = vmatmul.f32.gmra.mxu0 %v732
  %v819 = vpop.f32.mrf.mxu0
  %v820 = vadd.f32 %v776, %v819
  %821 = vmatmul.f32.gmra.mxu0 %v735
  %v822 = vpop.f32.mrf.mxu0
  %v823 = vadd.f32 %v779, %v822
  %824 = vmatmul.f32.gmra.mxu0 %v738
  %v825 = vpop.f32.mrf.mxu0
  %v826 = vadd.f32 %v782, %v825
  %827 = vmatmul.f32.gmra.mxu0 %v741
  %v828 = vpop.f32.mrf.mxu0
  %v829 = vadd.f32 %v785, %v828
  %830 = vdwg.mxu0
  %s831 = scalar_lea.vmem %s3, 432
  %v832 = vld [vmem:[%s831] sm:$0xff]
  %v833 = vld [vmem:[%s831 + $0x8] sm:$0xff]
  %v834 = vld [vmem:[%s831 + $0x10] sm:$0xff]
  %v835 = vld [vmem:[%s831 + $0x18] sm:$0xff]
  %v836 = vld [vmem:[%s831 + $0x20] sm:$0xff]
  %v837 = vld [vmem:[%s831 + $0x28] sm:$0xff]
  %v838 = vld [vmem:[%s831 + $0x30] sm:$0xff]
  %v839 = vld [vmem:[%s831 + $0x38] sm:$0xff]
  %v840 = vld [vmem:[%s831 + $0x40] sm:$0xff]
  %841 = vmatpush.msra.mxu0 0.0
  %842 = vmatpush.msra.mxu0 0.0
  %843 = vmatpush.msra.mxu0 0.0
  %844 = vmatpush.msra.mxu0 0.0
  %845 = vmatpush.msra.mxu0 0.0
  %846 = vmatpush.msra.mxu0 0.0
  %847 = vmatpush.msra.mxu0 0.0
  %848 = vmatpush.msra.mxu0 %v840
  %849 = vmatpush.msra.mxu0 %v839
  %850 = vmatpush.msra.mxu0 %v838
  %851 = vmatpush.msra.mxu0 %v837
  %852 = vmatpush.msra.mxu0 %v836
  %853 = vmatpush.msra.mxu0 %v835
  %854 = vmatpush.msra.mxu0 %v834
  %855 = vmatpush.msra.mxu0 %v833
  %856 = vmatpush.msra.mxu0 %v832
  %857 = vmatmul.f32.gmra.mxu0 %v723
  %v858 = vpop.f32.mrf.mxu0
  %v859 = vadd.f32 0.0, %v858
  %860 = vmatmul.f32.gmra.mxu0 %v726
  %v861 = vpop.f32.mrf.mxu0
  %v862 = vadd.f32 0.0, %v861
  %863 = vmatmul.f32.gmra.mxu0 %v729
  %v864 = vpop.f32.mrf.mxu0
  %v865 = vadd.f32 0.0, %v864
  %866 = vmatmul.f32.gmra.mxu0 %v732
  %v867 = vpop.f32.mrf.mxu0
  %v868 = vadd.f32 0.0, %v867
  %869 = vmatmul.f32.gmra.mxu0 %v735
  %v870 = vpop.f32.mrf.mxu0
  %v871 = vadd.f32 0.0, %v870
  %872 = vmatmul.f32.gmra.mxu0 %v738
  %v873 = vpop.f32.mrf.mxu0
  %v874 = vadd.f32 0.0, %v873
  %875 = vmatmul.f32.gmra.mxu0 %v741
  %v876 = vpop.f32.mrf.mxu0
  %v877 = vadd.f32 0.0, %v876
  %878 = vmatmul.f32.gmra.mxu0 %v744
  %v879 = vpop.f32.mrf.mxu0
  %v880 = vadd.f32 0.0, %v879
  %881 = vdwg.mxu0
  %882 = vmatpush.msra.mxu0 0.0
  %883 = vmatpush.msra.mxu0 0.0
  %884 = vmatpush.msra.mxu0 0.0
  %885 = vmatpush.msra.mxu0 0.0
  %886 = vmatpush.msra.mxu0 0.0
  %887 = vmatpush.msra.mxu0 0.0
  %888 = vmatpush.msra.mxu0 0.0
  %889 = vmatpush.msra.mxu0 %v710
  %890 = vmatpush.msra.mxu0 %v709
  %891 = vmatpush.msra.mxu0 %v708
  %892 = vmatpush.msra.mxu0 %v707
  %893 = vmatpush.msra.mxu0 %v706
  %894 = vmatpush.msra.mxu0 %v705
  %895 = vmatpush.msra.mxu0 %v704
  %896 = vmatpush.msra.mxu0 %v703
  %897 = vmatpush.msra.mxu0 %v702
  %898 = vmatmul.f32.gmra.mxu0 %v788
  %v899 = vpop.f32.mrf.mxu0
  %v900 = vadd.f32 %v859, %v899
  %901 = vmatmul.f32.gmra.mxu0 %v723
  %v902 = vpop.f32.mrf.mxu0
  %v903 = vadd.f32 %v862, %v902
  %904 = vmatmul.f32.gmra.mxu0 %v726
  %v905 = vpop.f32.mrf.mxu0
  %v906 = vadd.f32 %v865, %v905
  %907 = vmatmul.f32.gmra.mxu0 %v729
  %v908 = vpop.f32.mrf.mxu0
  %v909 = vadd.f32 %v868, %v908
  %910 = vmatmul.f32.gmra.mxu0 %v732
  %v911 = vpop.f32.mrf.mxu0
  %v912 = vadd.f32 %v871, %v911
  %913 = vmatmul.f32.gmra.mxu0 %v735
  %v914 = vpop.f32.mrf.mxu0
  %v915 = vadd.f32 %v874, %v914
  %916 = vmatmul.f32.gmra.mxu0 %v738
  %v917 = vpop.f32.mrf.mxu0
  %v918 = vadd.f32 %v877, %v917
  %919 = vmatmul.f32.gmra.mxu0 %v741
  %v920 = vpop.f32.mrf.mxu0
  %v921 = vadd.f32 %v880, %v920
  %922 = vdwg.mxu0
  %s923 = scalar_lea.vmem %s3, 144
  %v924 = vld [vmem:[%s923] sm:$0xff]
  %v925 = vld [vmem:[%s923 + $0x8] sm:$0xff]
  %v926 = vld [vmem:[%s923 + $0x10] sm:$0xff]
  %v927 = vld [vmem:[%s923 + $0x18] sm:$0xff]
  %v928 = vld [vmem:[%s923 + $0x20] sm:$0xff]
  %v929 = vld [vmem:[%s923 + $0x28] sm:$0xff]
  %v930 = vld [vmem:[%s923 + $0x30] sm:$0xff]
  %v931 = vld [vmem:[%s923 + $0x38] sm:$0xff]
  %v932 = vld [vmem:[%s923 + $0x40] sm:$0xff]
  %v934 = vsel %vm721, %v689, 0
  %936 = vmatpush.msra.mxu0 0.0
  %937 = vmatpush.msra.mxu0 0.0
  %938 = vmatpush.msra.mxu0 0.0
  %939 = vmatpush.msra.mxu0 0.0
  %940 = vmatpush.msra.mxu0 0.0
  %941 = vmatpush.msra.mxu0 0.0
  %942 = vmatpush.msra.mxu0 0.0
  %943 = vmatpush.msra.mxu0 %v932
  %944 = vmatpush.msra.mxu0 %v931
  %945 = vmatpush.msra.mxu0 %v930
  %946 = vmatpush.msra.mxu0 %v929
  %947 = vmatpush.msra.mxu0 %v928
  %948 = vmatpush.msra.mxu0 %v927
  %949 = vmatpush.msra.mxu0 %v926
  %950 = vmatpush.msra.mxu0 %v925
  %951 = vmatpush.msra.mxu0 %v924
  %952 = vmatmul.f32.gmra.mxu0 %v726
  %v953 = vpop.f32.mrf.mxu0
  %v954 = vadd.f32 0.0, %v953
  %955 = vmatmul.f32.gmra.mxu0 %v729
  %v956 = vpop.f32.mrf.mxu0
  %v957 = vadd.f32 0.0, %v956
  %958 = vmatmul.f32.gmra.mxu0 %v732
  %v959 = vpop.f32.mrf.mxu0
  %v960 = vadd.f32 0.0, %v959
  %961 = vmatmul.f32.gmra.mxu0 %v735
  %v962 = vpop.f32.mrf.mxu0
  %v963 = vadd.f32 0.0, %v962
  %964 = vmatmul.f32.gmra.mxu0 %v738
  %v965 = vpop.f32.mrf.mxu0
  %v966 = vadd.f32 0.0, %v965
  %967 = vmatmul.f32.gmra.mxu0 %v741
  %v968 = vpop.f32.mrf.mxu0
  %v969 = vadd.f32 0.0, %v968
  %970 = vmatmul.f32.gmra.mxu0 %v744
  %v971 = vpop.f32.mrf.mxu0
  %v972 = vadd.f32 0.0, %v971
  %973 = vmatmul.f32.gmra.mxu0 %v934
  %v974 = vpop.f32.mrf.mxu0
  %v975 = vadd.f32 0.0, %v974
  %976 = vdwg.mxu0
  %v977 = vadd.f32 %v808, %v954
  %v978 = vadd.f32 %v811, %v957
  %v979 = vadd.f32 %v814, %v960
  %v980 = vadd.f32 %v817, %v963
  %v981 = vadd.f32 %v820, %v966
  %v982 = vadd.f32 %v823, %v969
  %v983 = vadd.f32 %v826, %v972
  %v984 = vadd.f32 %v829, %v975
  %s985 = scalar_lea.vmem %s3, 504
  %v986 = vld [vmem:[%s985] sm:$0xff]
  %v987 = vld [vmem:[%s985 + $0x8] sm:$0xff]
  %v988 = vld [vmem:[%s985 + $0x10] sm:$0xff]
  %v989 = vld [vmem:[%s985 + $0x18] sm:$0xff]
  %v990 = vld [vmem:[%s985 + $0x20] sm:$0xff]
  %v991 = vld [vmem:[%s985 + $0x28] sm:$0xff]
  %v992 = vld [vmem:[%s985 + $0x30] sm:$0xff]
  %v993 = vld [vmem:[%s985 + $0x38] sm:$0xff]
  %v994 = vld [vmem:[%s985 + $0x40] sm:$0xff]
  %995 = vmatpush.msra.mxu0 0.0
  %996 = vmatpush.msra.mxu0 0.0
  %997 = vmatpush.msra.mxu0 0.0
  %998 = vmatpush.msra.mxu0 0.0
  %999 = vmatpush.msra.mxu0 0.0
  %1000 = vmatpush.msra.mxu0 0.0
  %1001 = vmatpush.msra.mxu0 0.0
  %1002 = vmatpush.msra.mxu0 %v994
  %1003 = vmatpush.msra.mxu0 %v993
  %1004 = vmatpush.msra.mxu0 %v992
  %1005 = vmatpush.msra.mxu0 %v991
  %1006 = vmatpush.msra.mxu0 %v990
  %1007 = vmatpush.msra.mxu0 %v989
  %1008 = vmatpush.msra.mxu0 %v988
  %1009 = vmatpush.msra.mxu0 %v987
  %1010 = vmatpush.msra.mxu0 %v986
  %1011 = vmatmul.f32.gmra.mxu0 %v726
  %v1012 = vpop.f32.mrf.mxu0
  %v1013 = vadd.f32 0.0, %v1012
  %1014 = vmatmul.f32.gmra.mxu0 %v729
  %v1015 = vpop.f32.mrf.mxu0
  %v1016 = vadd.f32 0.0, %v1015
  %1017 = vmatmul.f32.gmra.mxu0 %v732
  %v1018 = vpop.f32.mrf.mxu0
  %v1019 = vadd.f32 0.0, %v1018
  %1020 = vmatmul.f32.gmra.mxu0 %v735
  %v1021 = vpop.f32.mrf.mxu0
  %v1022 = vadd.f32 0.0, %v1021
  %1023 = vmatmul.f32.gmra.mxu0 %v738
  %v1024 = vpop.f32.mrf.mxu0
  %v1025 = vadd.f32 0.0, %v1024
  %1026 = vmatmul.f32.gmra.mxu0 %v741
  %v1027 = vpop.f32.mrf.mxu0
  %v1028 = vadd.f32 0.0, %v1027
  %1029 = vmatmul.f32.gmra.mxu0 %v744
  %v1030 = vpop.f32.mrf.mxu0
  %v1031 = vadd.f32 0.0, %v1030
  %1032 = vmatmul.f32.gmra.mxu0 %v934
  %v1033 = vpop.f32.mrf.mxu0
  %v1034 = vadd.f32 0.0, %v1033
  %1035 = vdwg.mxu0
  %v1036 = vadd.f32 %v900, %v1013
  %v1037 = vadd.f32 %v903, %v1016
  %v1038 = vadd.f32 %v906, %v1019
  %v1039 = vadd.f32 %v909, %v1022
  %v1040 = vadd.f32 %v912, %v1025
  %v1041 = vadd.f32 %v915, %v1028
  %v1042 = vadd.f32 %v918, %v1031
  %v1043 = vadd.f32 %v921, %v1034
  %s1044 = scalar_lea.vmem %s3, 216
  %v1045 = vld [vmem:[%s1044] sm:$0xff]
  %v1046 = vld [vmem:[%s1044 + $0x8] sm:$0xff]
  %v1047 = vld [vmem:[%s1044 + $0x10] sm:$0xff]
  %v1048 = vld [vmem:[%s1044 + $0x18] sm:$0xff]
  %v1049 = vld [vmem:[%s1044 + $0x20] sm:$0xff]
  %v1050 = vld [vmem:[%s1044 + $0x28] sm:$0xff]
  %v1051 = vld [vmem:[%s1044 + $0x30] sm:$0xff]
  %v1052 = vld [vmem:[%s1044 + $0x38] sm:$0xff]
  %v1053 = vld [vmem:[%s1044 + $0x40] sm:$0xff]
  %v1055 = vsel %vm721, %v690, 0
  %1057 = vmatpush.msra.mxu0 0.0
  %1058 = vmatpush.msra.mxu0 0.0
  %1059 = vmatpush.msra.mxu0 0.0
  %1060 = vmatpush.msra.mxu0 0.0
  %1061 = vmatpush.msra.mxu0 0.0
  %1062 = vmatpush.msra.mxu0 0.0
  %1063 = vmatpush.msra.mxu0 0.0
  %1064 = vmatpush.msra.mxu0 %v1053
  %1065 = vmatpush.msra.mxu0 %v1052
  %1066 = vmatpush.msra.mxu0 %v1051
  %1067 = vmatpush.msra.mxu0 %v1050
  %1068 = vmatpush.msra.mxu0 %v1049
  %1069 = vmatpush.msra.mxu0 %v1048
  %1070 = vmatpush.msra.mxu0 %v1047
  %1071 = vmatpush.msra.mxu0 %v1046
  %1072 = vmatpush.msra.mxu0 %v1045
  %1073 = vmatmul.f32.gmra.mxu0 %v729
  %v1074 = vpop.f32.mrf.mxu0
  %v1075 = vadd.f32 0.0, %v1074
  %1076 = vmatmul.f32.gmra.mxu0 %v732
  %v1077 = vpop.f32.mrf.mxu0
  %v1078 = vadd.f32 0.0, %v1077
  %1079 = vmatmul.f32.gmra.mxu0 %v735
  %v1080 = vpop.f32.mrf.mxu0
  %v1081 = vadd.f32 0.0, %v1080
  %1082 = vmatmul.f32.gmra.mxu0 %v738
  %v1083 = vpop.f32.mrf.mxu0
  %v1084 = vadd.f32 0.0, %v1083
  %1085 = vmatmul.f32.gmra.mxu0 %v741
  %v1086 = vpop.f32.mrf.mxu0
  %v1087 = vadd.f32 0.0, %v1086
  %1088 = vmatmul.f32.gmra.mxu0 %v744
  %v1089 = vpop.f32.mrf.mxu0
  %v1090 = vadd.f32 0.0, %v1089
  %1091 = vmatmul.f32.gmra.mxu0 %v934
  %v1092 = vpop.f32.mrf.mxu0
  %v1093 = vadd.f32 0.0, %v1092
  %1094 = vmatmul.f32.gmra.mxu0 %v1055
  %v1095 = vpop.f32.mrf.mxu0
  %v1096 = vadd.f32 0.0, %v1095
  %1097 = vdwg.mxu0
  %v1098 = vadd.f32 %v977, %v1075
  %v1099 = vadd.f32 %v978, %v1078
  %v1100 = vadd.f32 %v979, %v1081
  %v1101 = vadd.f32 %v980, %v1084
  %v1102 = vadd.f32 %v981, %v1087
  %v1103 = vadd.f32 %v982, %v1090
  %v1104 = vadd.f32 %v983, %v1093
  %v1105 = vadd.f32 %v984, %v1096
  %s1106 = scalar_lea.vmem %s3, 576
  %v1107 = vld [vmem:[%s1106] sm:$0xff]
  %v1108 = vld [vmem:[%s1106 + $0x8] sm:$0xff]
  %v1109 = vld [vmem:[%s1106 + $0x10] sm:$0xff]
  %v1110 = vld [vmem:[%s1106 + $0x18] sm:$0xff]
  %v1111 = vld [vmem:[%s1106 + $0x20] sm:$0xff]
  %v1112 = vld [vmem:[%s1106 + $0x28] sm:$0xff]
  %v1113 = vld [vmem:[%s1106 + $0x30] sm:$0xff]
  %v1114 = vld [vmem:[%s1106 + $0x38] sm:$0xff]
  %v1115 = vld [vmem:[%s1106 + $0x40] sm:$0xff]
  %1116 = vmatpush.msra.mxu0 0.0
  %1117 = vmatpush.msra.mxu0 0.0
  %1118 = vmatpush.msra.mxu0 0.0
  %1119 = vmatpush.msra.mxu0 0.0
  %1120 = vmatpush.msra.mxu0 0.0
  %1121 = vmatpush.msra.mxu0 0.0
  %1122 = vmatpush.msra.mxu0 0.0
  %1123 = vmatpush.msra.mxu0 %v1115
  %1124 = vmatpush.msra.mxu0 %v1114
  %1125 = vmatpush.msra.mxu0 %v1113
  %1126 = vmatpush.msra.mxu0 %v1112
  %1127 = vmatpush.msra.mxu0 %v1111
  %1128 = vmatpush.msra.mxu0 %v1110
  %1129 = vmatpush.msra.mxu0 %v1109
  %1130 = vmatpush.msra.mxu0 %v1108
  %1131 = vmatpush.msra.mxu0 %v1107
  %1132 = vmatmul.f32.gmra.mxu0 %v729
  %v1133 = vpop.f32.mrf.mxu0
  %v1134 = vadd.f32 0.0, %v1133
  %1135 = vmatmul.f32.gmra.mxu0 %v732
  %v1136 = vpop.f32.mrf.mxu0
  %v1137 = vadd.f32 0.0, %v1136
  %1138 = vmatmul.f32.gmra.mxu0 %v735
  %v1139 = vpop.f32.mrf.mxu0
  %v1140 = vadd.f32 0.0, %v1139
  %1141 = vmatmul.f32.gmra.mxu0 %v738
  %v1142 = vpop.f32.mrf.mxu0
  %v1143 = vadd.f32 0.0, %v1142
  %1144 = vmatmul.f32.gmra.mxu0 %v741
  %v1145 = vpop.f32.mrf.mxu0
  %v1146 = vadd.f32 0.0, %v1145
  %1147 = vmatmul.f32.gmra.mxu0 %v744
  %v1148 = vpop.f32.mrf.mxu0
  %v1149 = vadd.f32 0.0, %v1148
  %1150 = vmatmul.f32.gmra.mxu0 %v934
  %v1151 = vpop.f32.mrf.mxu0
  %v1152 = vadd.f32 0.0, %v1151
  %1153 = vmatmul.f32.gmra.mxu0 %v1055
  %v1154 = vpop.f32.mrf.mxu0
  %v1155 = vadd.f32 0.0, %v1154
  %1156 = vdwg.mxu0
  %v1157 = vadd.f32 %v1036, %v1134
  %v1158 = vadd.f32 %v1037, %v1137
  %v1159 = vadd.f32 %v1038, %v1140
  %v1160 = vadd.f32 %v1039, %v1143
  %v1161 = vadd.f32 %v1040, %v1146
  %v1162 = vadd.f32 %v1041, %v1149
  %v1163 = vadd.f32 %v1042, %v1152
  %v1164 = vadd.f32 %v1043, %v1155
  %s1165 = scalar_lea.vmem %s3, 288
  %v1166 = vld [vmem:[%s1165] sm:$0xff]
  %v1167 = vld [vmem:[%s1165 + $0x8] sm:$0xff]
  %v1168 = vld [vmem:[%s1165 + $0x10] sm:$0xff]
  %v1169 = vld [vmem:[%s1165 + $0x18] sm:$0xff]
  %v1170 = vld [vmem:[%s1165 + $0x20] sm:$0xff]
  %v1171 = vld [vmem:[%s1165 + $0x28] sm:$0xff]
  %v1172 = vld [vmem:[%s1165 + $0x30] sm:$0xff]
  %v1173 = vld [vmem:[%s1165 + $0x38] sm:$0xff]
  %v1174 = vld [vmem:[%s1165 + $0x40] sm:$0xff]
  %v1176 = vsel %vm721, %v691, 0
  %1178 = vmatpush.msra.mxu0 0.0
  %1179 = vmatpush.msra.mxu0 0.0
  %1180 = vmatpush.msra.mxu0 0.0
  %1181 = vmatpush.msra.mxu0 0.0
  %1182 = vmatpush.msra.mxu0 0.0
  %1183 = vmatpush.msra.mxu0 0.0
  %1184 = vmatpush.msra.mxu0 0.0
  %1185 = vmatpush.msra.mxu0 %v1174
  %1186 = vmatpush.msra.mxu0 %v1173
  %1187 = vmatpush.msra.mxu0 %v1172
  %1188 = vmatpush.msra.mxu0 %v1171
  %1189 = vmatpush.msra.mxu0 %v1170
  %1190 = vmatpush.msra.mxu0 %v1169
  %1191 = vmatpush.msra.mxu0 %v1168
  %1192 = vmatpush.msra.mxu0 %v1167
  %1193 = vmatpush.msra.mxu0 %v1166
  %1194 = vmatmul.f32.gmra.mxu0 %v732
  %v1195 = vpop.f32.mrf.mxu0
  %v1196 = vadd.f32 0.0, %v1195
  %1197 = vmatmul.f32.gmra.mxu0 %v735
  %v1198 = vpop.f32.mrf.mxu0
  %v1199 = vadd.f32 0.0, %v1198
  %1200 = vmatmul.f32.gmra.mxu0 %v738
  %v1201 = vpop.f32.mrf.mxu0
  %v1202 = vadd.f32 0.0, %v1201
  %1203 = vmatmul.f32.gmra.mxu0 %v741
  %v1204 = vpop.f32.mrf.mxu0
  %v1205 = vadd.f32 0.0, %v1204
  %1206 = vmatmul.f32.gmra.mxu0 %v744
  %v1207 = vpop.f32.mrf.mxu0
  %v1208 = vadd.f32 0.0, %v1207
  %1209 = vmatmul.f32.gmra.mxu0 %v934
  %v1210 = vpop.f32.mrf.mxu0
  %v1211 = vadd.f32 0.0, %v1210
  %1212 = vmatmul.f32.gmra.mxu0 %v1055
  %v1213 = vpop.f32.mrf.mxu0
  %v1214 = vadd.f32 0.0, %v1213
  %1215 = vmatmul.f32.gmra.mxu0 %v1176
  %v1216 = vpop.f32.mrf.mxu0
  %v1217 = vadd.f32 0.0, %v1216
  %1218 = vdwg.mxu0
  %v1219 = vadd.f32 %v1098, %v1196
  %v1220 = vadd.f32 %v1099, %v1199
  %v1221 = vadd.f32 %v1100, %v1202
  %v1222 = vadd.f32 %v1101, %v1205
  %v1223 = vadd.f32 %v1102, %v1208
  %v1224 = vadd.f32 %v1103, %v1211
  %v1225 = vadd.f32 %v1104, %v1214
  %v1226 = vadd.f32 %v1105, %v1217
  %s1227 = scalar_lea.vmem %s3, 648
  %v1228 = vld [vmem:[%s1227] sm:$0xff]
  %v1229 = vld [vmem:[%s1227 + $0x8] sm:$0xff]
  %v1230 = vld [vmem:[%s1227 + $0x10] sm:$0xff]
  %v1231 = vld [vmem:[%s1227 + $0x18] sm:$0xff]
  %v1232 = vld [vmem:[%s1227 + $0x20] sm:$0xff]
  %v1233 = vld [vmem:[%s1227 + $0x28] sm:$0xff]
  %v1234 = vld [vmem:[%s1227 + $0x30] sm:$0xff]
  %v1235 = vld [vmem:[%s1227 + $0x38] sm:$0xff]
  %v1236 = vld [vmem:[%s1227 + $0x40] sm:$0xff]
  %1237 = vmatpush.msra.mxu0 0.0
  %1238 = vmatpush.msra.mxu0 0.0
  %1239 = vmatpush.msra.mxu0 0.0
  %1240 = vmatpush.msra.mxu0 0.0
  %1241 = vmatpush.msra.mxu0 0.0
  %1242 = vmatpush.msra.mxu0 0.0
  %1243 = vmatpush.msra.mxu0 0.0
  %1244 = vmatpush.msra.mxu0 %v1236
  %1245 = vmatpush.msra.mxu0 %v1235
  %1246 = vmatpush.msra.mxu0 %v1234
  %1247 = vmatpush.msra.mxu0 %v1233
  %1248 = vmatpush.msra.mxu0 %v1232
  %1249 = vmatpush.msra.mxu0 %v1231
  %1250 = vmatpush.msra.mxu0 %v1230
  %1251 = vmatpush.msra.mxu0 %v1229
  %1252 = vmatpush.msra.mxu0 %v1228
  %1253 = vmatmul.f32.gmra.mxu0 %v732
  %v1254 = vpop.f32.mrf.mxu0
  %v1255 = vadd.f32 0.0, %v1254
  %1256 = vmatmul.f32.gmra.mxu0 %v735
  %v1257 = vpop.f32.mrf.mxu0
  %v1258 = vadd.f32 0.0, %v1257
  %1259 = vmatmul.f32.gmra.mxu0 %v738
  %v1260 = vpop.f32.mrf.mxu0
  %v1261 = vadd.f32 0.0, %v1260
  %1262 = vmatmul.f32.gmra.mxu0 %v741
  %v1263 = vpop.f32.mrf.mxu0
  %v1264 = vadd.f32 0.0, %v1263
  %1265 = vmatmul.f32.gmra.mxu0 %v744
  %v1266 = vpop.f32.mrf.mxu0
  %v1267 = vadd.f32 0.0, %v1266
  %1268 = vmatmul.f32.gmra.mxu0 %v934
  %v1269 = vpop.f32.mrf.mxu0
  %v1270 = vadd.f32 0.0, %v1269
  %1271 = vmatmul.f32.gmra.mxu0 %v1055
  %v1272 = vpop.f32.mrf.mxu0
  %v1273 = vadd.f32 0.0, %v1272
  %1274 = vmatmul.f32.gmra.mxu0 %v1176
  %v1275 = vpop.f32.mrf.mxu0
  %v1276 = vadd.f32 0.0, %v1275
  %1277 = vdwg.mxu0
  %v1278 = vadd.f32 %v1157, %v1255
  %v1279 = vadd.f32 %v1158, %v1258
  %v1280 = vadd.f32 %v1159, %v1261
  %v1281 = vadd.f32 %v1160, %v1264
  %v1282 = vadd.f32 %v1161, %v1267
  %v1283 = vadd.f32 %v1162, %v1270
  %v1284 = vadd.f32 %v1163, %v1273
  %v1285 = vadd.f32 %v1164, %v1276
  %v1286 = vmax.f32 %v1219, %v1278
  %v1287 = vmax.f32 %v1220, %v1279
  %v1288 = vmax.f32 %v1221, %v1280
  %v1289 = vmax.f32 %v1222, %v1281
  %v1290 = vmax.f32 %v1223, %v1282
  %v1291 = vmax.f32 %v1224, %v1283
  %v1292 = vmax.f32 %v1225, %v1284
  %v1293 = vmax.f32 %v1226, %v1285
  %v1294 = vmax.f32 %v1286, %v1287
  %v1295 = vld [vmem:[%s4] sm:$0x1]
  %v1297 = vperm.slane %v1295, 0
  %v1299 = vadd.f32 %v1294, %v1297
  %v1300 = vmax.f32 %v1299, 0.0
  %v1301 = vld [vmem:[%s5] sm:$0xff]
  %v1302 = vld [vmem:[%s5 + $0x8] sm:$0xff]
  %v1303 = vld [vmem:[%s5 + $0x10] sm:$0xff]
  %v1304 = vld [vmem:[%s5 + $0x18] sm:$0xff]
  %v1305 = vld [vmem:[%s5 + $0x20] sm:$0xff]
  %v1306 = vld [vmem:[%s5 + $0x28] sm:$0xff]
  %v1307 = vld [vmem:[%s5 + $0x30] sm:$0xff]
  %v1308 = vld [vmem:[%s5 + $0x38] sm:$0xff]
  %v1309 = vmax.f32 %v1288, %v1289
  %v1310 = vadd.f32 %v1309, %v1297
  %v1311 = vmax.f32 %v1310, 0.0
  %s1312 = scalar_lea.vmem %s5, 64
  %v1313 = vld [vmem:[%s1312] sm:$0xff]
  %v1314 = vld [vmem:[%s1312 + $0x8] sm:$0xff]
  %v1315 = vld [vmem:[%s1312 + $0x10] sm:$0xff]
  %v1316 = vld [vmem:[%s1312 + $0x18] sm:$0xff]
  %v1317 = vld [vmem:[%s1312 + $0x20] sm:$0xff]
  %v1318 = vld [vmem:[%s1312 + $0x28] sm:$0xff]
  %v1319 = vld [vmem:[%s1312 + $0x30] sm:$0xff]
  %v1320 = vld [vmem:[%s1312 + $0x38] sm:$0xff]
  %vm1321 = vcmask 523264
  %v1323 = vsel %vm1321, %v1311, 0
  %1325 = vmatpush.msra.mxu0 0.0
  %1326 = vmatpush.msra.mxu0 0.0
  %1327 = vmatpush.msra.mxu0 0.0
  %1328 = vmatpush.msra.mxu0 0.0
  %1329 = vmatpush.msra.mxu0 0.0
  %1330 = vmatpush.msra.mxu0 0.0
  %1331 = vmatpush.msra.mxu0 0.0
  %1332 = vmatpush.msra.mxu0 0.0
  %1333 = vmatpush.msra.mxu0 %v1320
  %1334 = vmatpush.msra.mxu0 %v1319
  %1335 = vmatpush.msra.mxu0 %v1318
  %1336 = vmatpush.msra.mxu0 %v1317
  %1337 = vmatpush.msra.mxu0 %v1316
  %1338 = vmatpush.msra.mxu0 %v1315
  %1339 = vmatpush.msra.mxu0 %v1314
  %1340 = vmatpush.msra.mxu0 %v1313
  %1341 = vmatmul.f32.gmra.mxu0 %v1323
  %v1342 = vpop.f32.mrf.mxu0
  %v1343 = vadd.f32 0.0, %v1342
  %1344 = vdwg.mxu0
  %v1346 = vsel %vm1321, %v1300, 0
  %1348 = vmatpush.msra.mxu0 0.0
  %1349 = vmatpush.msra.mxu0 0.0
  %1350 = vmatpush.msra.mxu0 0.0
  %1351 = vmatpush.msra.mxu0 0.0
  %1352 = vmatpush.msra.mxu0 0.0
  %1353 = vmatpush.msra.mxu0 0.0
  %1354 = vmatpush.msra.mxu0 0.0
  %1355 = vmatpush.msra.mxu0 0.0
  %1356 = vmatpush.msra.mxu0 %v1308
  %1357 = vmatpush.msra.mxu0 %v1307
  %1358 = vmatpush.msra.mxu0 %v1306
  %1359 = vmatpush.msra.mxu0 %v1305
  %1360 = vmatpush.msra.mxu0 %v1304
  %1361 = vmatpush.msra.mxu0 %v1303
  %1362 = vmatpush.msra.mxu0 %v1302
  %1363 = vmatpush.msra.mxu0 %v1301
  %1364 = vmatmul.f32.gmra.mxu0 %v1346
  %v1365 = vpop.f32.mrf.mxu0
  %v1366 = vadd.f32 %v1343, %v1365
  %1367 = vdwg.mxu0
  %v1368 = vmax.f32 %v1290, %v1291
  %v1369 = vadd.f32 %v1368, %v1297
  %v1370 = vmax.f32 %v1369, 0.0
  %s1371 = scalar_lea.vmem %s5, 128
  %v1372 = vld [vmem:[%s1371] sm:$0xff]
  %v1373 = vld [vmem:[%s1371 + $0x8] sm:$0xff]
  %v1374 = vld [vmem:[%s1371 + $0x10] sm:$0xff]
  %v1375 = vld [vmem:[%s1371 + $0x18] sm:$0xff]
  %v1376 = vld [vmem:[%s1371 + $0x20] sm:$0xff]
  %v1377 = vld [vmem:[%s1371 + $0x28] sm:$0xff]
  %v1378 = vld [vmem:[%s1371 + $0x30] sm:$0xff]
  %v1379 = vld [vmem:[%s1371 + $0x38] sm:$0xff]
  %v1381 = vsel %vm1321, %v1370, 0
  %1383 = vmatpush.msra.mxu0 0.0
  %1384 = vmatpush.msra.mxu0 0.0
  %1385 = vmatpush.msra.mxu0 0.0
  %1386 = vmatpush.msra.mxu0 0.0
  %1387 = vmatpush.msra.mxu0 0.0
  %1388 = vmatpush.msra.mxu0 0.0
  %1389 = vmatpush.msra.mxu0 0.0
  %1390 = vmatpush.msra.mxu0 0.0
  %1391 = vmatpush.msra.mxu0 %v1379
  %1392 = vmatpush.msra.mxu0 %v1378
  %1393 = vmatpush.msra.mxu0 %v1377
  %1394 = vmatpush.msra.mxu0 %v1376
  %1395 = vmatpush.msra.mxu0 %v1375
  %1396 = vmatpush.msra.mxu0 %v1374
  %1397 = vmatpush.msra.mxu0 %v1373
  %1398 = vmatpush.msra.mxu0 %v1372
  %1399 = vmatmul.f32.gmra.mxu0 %v1381
  %v1400 = vpop.f32.mrf.mxu0
  %v1401 = vadd.f32 0.0, %v1400
  %1402 = vdwg.mxu0
  %v1403 = vadd.f32 %v1366, %v1401
  %v1404 = vmax.f32 %v1292, %v1293
  %v1405 = vadd.f32 %v1404, %v1297
  %v1406 = vmax.f32 %v1405, 0.0
  %s1407 = scalar_lea.vmem %s5, 192
  %v1408 = vld [vmem:[%s1407] sm:$0xff]
  %v1409 = vld [vmem:[%s1407 + $0x8] sm:$0xff]
  %v1410 = vld [vmem:[%s1407 + $0x10] sm:$0xff]
  %v1411 = vld [vmem:[%s1407 + $0x18] sm:$0xff]
  %v1412 = vld [vmem:[%s1407 + $0x20] sm:$0xff]
  %v1413 = vld [vmem:[%s1407 + $0x28] sm:$0xff]
  %v1414 = vld [vmem:[%s1407 + $0x30] sm:$0xff]
  %v1415 = vld [vmem:[%s1407 + $0x38] sm:$0xff]
  %v1417 = vsel %vm1321, %v1406, 0
  %1419 = vmatpush.msra.mxu0 0.0
  %1420 = vmatpush.msra.mxu0 0.0
  %1421 = vmatpush.msra.mxu0 0.0
  %1422 = vmatpush.msra.mxu0 0.0
  %1423 = vmatpush.msra.mxu0 0.0
  %1424 = vmatpush.msra.mxu0 0.0
  %1425 = vmatpush.msra.mxu0 0.0
  %1426 = vmatpush.msra.mxu0 0.0
  %1427 = vmatpush.msra.mxu0 %v1415
  %1428 = vmatpush.msra.mxu0 %v1414
  %1429 = vmatpush.msra.mxu0 %v1413
  %1430 = vmatpush.msra.mxu0 %v1412
  %1431 = vmatpush.msra.mxu0 %v1411
  %1432 = vmatpush.msra.mxu0 %v1410
  %1433 = vmatpush.msra.mxu0 %v1409
  %1434 = vmatpush.msra.mxu0 %v1408
  %1435 = vmatmul.f32.gmra.mxu0 %v1417
  %v1436 = vpop.f32.mrf.mxu0
  %v1437 = vadd.f32 0.0, %v1436
  %1438 = vdwg.mxu0
  %v1439 = vadd.f32 %v1403, %v1437
  %v1440 = vld [vmem:[%s6] sm:$0x1]
  %v1442 = vperm.slane %v1440, 0
  %v1444 = vadd.f32 %v1439, %v1442
  %v1445 = vmax.f32 %v1444, 0.0
  %v1446 = vld [vmem:[%s7] sm:$0xff]
  %v1447 = vld [vmem:[%s7 + $0x8] sm:$0xff]
  %v1448 = vld [vmem:[%s7 + $0x10] sm:$0xff]
  %v1449 = vld [vmem:[%s7 + $0x18] sm:$0xff]
  %v1450 = vld [vmem:[%s7 + $0x20] sm:$0xff]
  %v1451 = vld [vmem:[%s7 + $0x28] sm:$0xff]
  %v1452 = vld [vmem:[%s7 + $0x30] sm:$0xff]
  %v1453 = vld [vmem:[%s7 + $0x38] sm:$0xff]
  %v1454 = vld [vmem:[%s7 + $0x40] sm:$0xff]
  %v1455 = vld [vmem:[%s7 + $0x48] sm:$0xff]
  %v1456 = vld [vmem:[%s7 + $0x50] sm:$0xff]
  %v1457 = vld [vmem:[%s7 + $0x58] sm:$0xff]
  %v1458 = vld [vmem:[%s7 + $0x60] sm:$0xff]
  %v1459 = vld [vmem:[%s7 + $0x68] sm:$0xff]
  %v1460 = vld [vmem:[%s7 + $0x70] sm:$0xff]
  %v1461 = vld [vmem:[%s7 + $0x78] sm:$0xff]
  %v1462 = vld [vmem:[%s8] sm:$0x1]
  %v1464 = vperm.slane %v1462, 0
  %1466 = vmatpush.msra.mxu0 %v1461
  %1467 = vmatpush.msra.mxu0 %v1460
  %1468 = vmatpush.msra.mxu0 %v1459
  %1469 = vmatpush.msra.mxu0 %v1458
  %1470 = vmatpush.msra.mxu0 %v1457
  %1471 = vmatpush.msra.mxu0 %v1456
  %1472 = vmatpush.msra.mxu0 %v1455
  %1473 = vmatpush.msra.mxu0 %v1454
  %1474 = vmatpush.msra.mxu0 %v1453
  %1475 = vmatpush.msra.mxu0 %v1452
  %1476 = vmatpush.msra.mxu0 %v1451
  %1477 = vmatpush.msra.mxu0 %v1450
  %1478 = vmatpush.msra.mxu0 %v1449
  %1479 = vmatpush.msra.mxu0 %v1448
  %1480 = vmatpush.msra.mxu0 %v1447
  %1481 = vmatpush.msra.mxu0 %v1446
  %1482 = vmatmul.f32.gmra.mxu0 %v1445
  %v1483 = vpop.f32.mrf.mxu0
  %v1484 = vadd.f32 %v1464, %v1483
  %1485 = vdwg.mxu0
  %v1486 = vmax.f32 %v1484, 0.0
  %v1487 = vld [vmem:[%s9] sm:$0xff]
  %v1488 = vld [vmem:[%s9 + $0x8] sm:$0xff]
  %v1489 = vld [vmem:[%s9 + $0x10] sm:$0xff]
  %v1490 = vld [vmem:[%s9 + $0x18] sm:$0xff]
  %v1491 = vld [vmem:[%s9 + $0x20] sm:$0xff]
  %v1492 = vld [vmem:[%s9 + $0x28] sm:$0xff]
  %v1493 = vld [vmem:[%s9 + $0x30] sm:$0xff]
  %v1494 = vld [vmem:[%s9 + $0x38] sm:$0xff]
  %v1495 = vld [vmem:[%s9 + $0x40] sm:$0xff]
  %v1496 = vld [vmem:[%s9 + $0x48] sm:$0xff]
  %v1497 = vld [vmem:[%s9 + $0x50] sm:$0xff]
  %v1498 = vld [vmem:[%s9 + $0x58] sm:$0xff]
  %v1499 = vld [vmem:[%s9 + $0x60] sm:$0xff]
  %v1500 = vld [vmem:[%s9 + $0x68] sm:$0xff]
  %v1501 = vld [vmem:[%s9 + $0x70] sm:$0xff]
  %v1502 = vld [vmem:[%s9 + $0x78] sm:$0xff]
  %v1503 = vld [vmem:[%s10] sm:$0x1]
  %v1505 = vperm.slane %v1503, 0
  %1507 = vmatpush.msra.mxu0 %v1502
  %1508 = vmatpush.msra.mxu0 %v1501
  %1509 = vmatpush.msra.mxu0 %v1500
  %1510 = vmatpush.msra.mxu0 %v1499
  %1511 = vmatpush.msra.mxu0 %v1498
  %1512 = vmatpush.msra.mxu0 %v1497
  %1513 = vmatpush.msra.mxu0 %v1496
  %1514 = vmatpush.msra.mxu0 %v1495
  %1515 = vmatpush.msra.mxu0 %v1494
  %1516 = vmatpush.msra.mxu0 %v1493
  %1517 = vmatpush.msra.mxu0 %v1492
  %1518 = vmatpush.msra.mxu0 %v1491
  %1519 = vmatpush.msra.mxu0 %v1490
  %1520 = vmatpush.msra.mxu0 %v1489
  %1521 = vmatpush.msra.mxu0 %v1488
  %1522 = vmatpush.msra.mxu0 %v1487
  %1523 = vmatmul.f32.gmra.mxu0 %v1486
  %v1524 = vpop.f32.mrf.mxu0
  %v1525 = vadd.f32 %v1505, %v1524
  %1526 = vdwg.mxu0
  %1527 = vst [vmem:[%s11] sm:$0xff] %v1525
  // Predicated region
  $region46: #{lenet_forward.1} parent=0 // pred_check
    _
  $region47: #{lenet_forward.1} parent=0 // pred_check_branch
    %1529 = sbr.rel (0) target = $region49
  $region48: #{lenet_forward.1} parent=0 // pred_region
    _
  $region49: #{lenet_forward.1} parent=0 // pred_fallthru
    _
  // Predicated region
  $region50: #{lenet_forward.1} parent=0 // pred_check
    _
  $region51: #{lenet_forward.1} parent=0 // pred_check_branch
    %1531 = sbr.rel (0) target = $region53
  $region52: #{lenet_forward.1} parent=0 // pred_region
    _
  $region53: #{lenet_forward.1} parent=0 // pred_fallthru
    _

</llo_original>
